<compile_context>
chip_gen: v7x
topology: tpu7x:2x2x1
jax: 0.10.0
libtpu: 0.0.40
codegen_flags: <defaults>
</compile_context>

<pallas_src>
import functools

import jax
import jax.numpy as jnp
import numpy as np
from jax import lax
from jax.experimental import pallas as pl

_EPS = 1e-5


# ----------------------------------------------------------------------------
# Fused Block kernel: runs once (no grid); whole batch packed into the lane axis
# ----------------------------------------------------------------------------
def block_kernel(x_ref, b1_ref, b2_ref, skipb_ref, shift_ref, csel_ref,
                 rsel_ref, bias1_ref, biasout_ref, out_ref):
    f32 = jnp.float32
    H = x_ref.shape[0]
    Ho, Kout = out_ref.shape            # Kout = N*Wo*Cout (128 lanes)
    Kmid = bias1_ref.shape[1]           # Kmid = N*W*Cout  (256 lanes)

    x = x_ref[...]                      # (H, N*W*Cin)  pre-ReLU input

    def sepconv(a, b_ref):
        # one wide MXU push: all 3 dy taps side-by-side along N (BN scale folded)
        p = jnp.dot(a, b_ref[...], preferred_element_type=f32)        # (H, 3*Kmid)
        p0 = p[:, 0:Kmid]               # tap dy=0 (contribution from row h-1)
        p1 = p[:, Kmid:2 * Kmid]        # tap dy=1
        p2 = p[:, 2 * Kmid:3 * Kmid]    # tap dy=2 (contribution from row h+1)
        # single fused [sd | su] shift matmul handles the dy taps + H zero-pad
        stacked = jnp.concatenate([p0, p2], axis=0)                    # (2H, Kmid)
        return p1 + jnp.dot(shift_ref[...], stacked,
                            preferred_element_type=f32)

    # rep branch: ReLU -> SepConv(Cin->Cout)+BN1 -> ReLU -> SepConv(Cout->Cout)+BN2
    a1 = jnp.maximum(x, 0.0)
    y1 = sepconv(a1, b1_ref) + bias1_ref[...]      # BN1 scale folded, bias here
    a2 = jnp.maximum(y1, 0.0)
    y2 = sepconv(a2, b2_ref)                       # BN2 bias deferred past pool

    # MaxPool(3, stride 2, pad 1): rows first (halves M of the column gather),
    # then one merged column-selector matmul; slices land on 8/128 boundaries.
    r = jnp.dot(rsel_ref[...], y2, preferred_element_type=f32)         # (3Ho, Kmid)
    rp = jnp.maximum(jnp.maximum(r[0:Ho], r[Ho:2 * Ho]), r[2 * Ho:3 * Ho])
    cp = jnp.dot(rp, csel_ref[...], preferred_element_type=f32)        # (Ho, 3*Kout)
    pooled = jnp.maximum(jnp.maximum(cp[:, 0:Kout], cp[:, Kout:2 * Kout]),
                         cp[:, 2 * Kout:3 * Kout])

    # skip branch: even-row select first, then strided 1x1 conv (skip-BN scale folded)
    xe = jnp.dot(rsel_ref[0:Ho, :], x, preferred_element_type=f32)     # (Ho, N*W*Cin)
    skip = jnp.dot(xe, skipb_ref[...], preferred_element_type=f32)     # (Ho, Kout)

    # final add: pooled rep + skip + (BN2 bias + skip-BN bias); lane-dense store
    out_ref[...] = pooled + skip + biasout_ref[...]


# ----------------------------------------------------------------------------
# Wrapper: NCHW in / NCHW out, single fused pallas_call, no grid
# ----------------------------------------------------------------------------
def block_forward(x_nchw, kp, *, H, W, in_f, out_f):
    N = x_nchw.shape[0]
    Ho, Wo = H // 2, W // 2
    Kin = N * W * in_f
    Kmid = N * W * out_f
    Kout = N * Wo * out_f

    # NCHW -> (H, N*W*Cin): batch packed into the lane axis (lane-dense I/O)
    x2d = jnp.transpose(x_nchw, (2, 0, 3, 1)).reshape(H, Kin)

    mm = lambda m, k, n: 2 * m * k * n
    flops = (mm(H, Kin, 3 * Kmid) + mm(H, 2 * H, Kmid)          # sepconv1
             + mm(H, Kmid, 3 * Kmid) + mm(H, 2 * H, Kmid)       # sepconv2
             + mm(3 * Ho, H, Kmid) + mm(Ho, Kmid, 3 * Kout)     # maxpool
             + mm(Ho, H, Kin) + mm(Ho, Kin, Kout))              # skip
    bytes_accessed = 4 * (H * Kin + Ho * Kout
                          + sum(int(np.prod(v.shape)) for v in kp.values()))

    out2d = pl.pallas_call(
        block_kernel,
        out_shape=jax.ShapeDtypeStruct((Ho, Kout), jnp.float32),
        cost_estimate=pl.CostEstimate(flops=int(flops), transcendentals=0,
                                      bytes_accessed=int(bytes_accessed)),
    )(x2d, kp["b1"], kp["b2"], kp["skipb"], kp["shift"], kp["csel"],
      kp["rsel"], kp["bias1"], kp["bias_out"])

    out = out2d.reshape(Ho, N, Wo, out_f)
    return jnp.transpose(out, (1, 3, 0, 2))          # -> NCHW


# ----------------------------------------------------------------------------
# Deterministic PyTorch-layout parameters
# ----------------------------------------------------------------------------
def init_torch_params(key, in_f=4, out_f=8):
    ks = jax.random.split(key, 8)
    tp = {
        "dw1_t": jax.random.normal(ks[0], (in_f, 1, 3, 3), jnp.float32) * 0.2,
        "pw1_t": jax.random.normal(ks[1], (out_f, in_f, 1, 1), jnp.float32) * 0.2,
        "dw2_t": jax.random.normal(ks[2], (out_f, 1, 3, 3), jnp.float32) * 0.2,
        "pw2_t": jax.random.normal(ks[3], (out_f, out_f, 1, 1), jnp.float32) * 0.2,
        "skip_t": jax.random.normal(ks[4], (out_f, in_f, 1, 1), jnp.float32) * 0.2,
    }

    def bn_params(k, c):
        k1, k2, k3, k4 = jax.random.split(k, 4)
        g = jax.random.uniform(k1, (c,), jnp.float32, 0.5, 1.5)
        b = jax.random.normal(k2, (c,), jnp.float32) * 0.1
        m = jax.random.normal(k3, (c,), jnp.float32) * 0.1
        v = jax.random.uniform(k4, (c,), jnp.float32, 0.5, 1.5)
        return g, b, m, v

    tp["bn1"] = bn_params(ks[5], out_f)
    tp["bn2"] = bn_params(ks[6], out_f)
    tp["bnskip"] = bn_params(ks[7], out_f)
    return tp


# ----------------------------------------------------------------------------
# Host-side kernel-parameter preparation (banded / one-hot matrices, folded BN)
# ----------------------------------------------------------------------------
def prepare_kernel_params(tp, *, N, H, W, in_f, out_f):
    Ho, Wo = H // 2, W // 2
    Ci, Co = in_f, out_f

    dw1 = np.transpose(np.asarray(tp["dw1_t"])[:, 0], (1, 2, 0))   # (3,3,Ci)
    pw1 = np.asarray(tp["pw1_t"])[:, :, 0, 0].T                    # (Ci,Co)
    dw2 = np.transpose(np.asarray(tp["dw2_t"])[:, 0], (1, 2, 0))   # (3,3,Co)
    pw2 = np.asarray(tp["pw2_t"])[:, :, 0, 0].T                    # (Co,Co)
    skip_w = np.asarray(tp["skip_t"])[:, :, 0, 0].T                # (Ci,Co)

    cw1 = dw1[:, :, :, None] * pw1[None, None, :, :]               # (3,3,Ci,Co)
    cw2 = dw2[:, :, :, None] * pw2[None, None, :, :]               # (3,3,Co,Co)

    def fold_bn(bn):
        g, b, m, v = (np.asarray(t) for t in bn)
        scale = g / np.sqrt(v + _EPS)
        bias = b - m * scale
        return scale, bias

    s1, o1 = fold_bn(tp["bn1"])
    s2, o2 = fold_bn(tp["bn2"])
    ssk, osk = fold_bn(tp["bnskip"])

    def banded(cw, ci, co, scale):
        # rows (n, w', ci) ; cols (dy, n, w, co): dy taps side-by-side along N,
        # block-diagonal over the batch, W zero-padding encoded, BN scale folded.
        B = np.zeros((N * W * ci, 3 * N * W * co), np.float32)
        for dy in range(3):
            for n in range(N):
                for w in range(W):
                    for dx in range(3):
                        wp = w + dx - 1
                        if 0 <= wp < W:
                            r0 = n * W * ci + wp * ci
                            c0 = dy * N * W * co + n * W * co + w * co
                            B[r0:r0 + ci, c0:c0 + co] = cw[dy, dx] * scale[None, :]
        return B

    b1 = banded(cw1, Ci, Co, s1)           # (N*W*Ci, 3*N*W*Co)
    b2 = banded(cw2, Co, Co, s2)           # (N*W*Co, 3*N*W*Co)

    # fused [sd | su] row-shift matrix: y[h] = p0[h-1] + p1[h] + p2[h+1] (zero pad)
    shift = np.zeros((H, 2 * H), np.float32)
    for h in range(H):
        if h - 1 >= 0:
            shift[h, h - 1] = 1.0          # sd block -> picks p0[h-1]
        if h + 1 < H:
            shift[h, H + h + 1] = 1.0      # su block -> picks p2[h+1]

    # stride-2 1x1 skip conv (even columns), block-diag over N, skip-BN scale folded
    skipb = np.zeros((N * W * Ci, N * Wo * Co), np.float32)
    for n in range(N):
        for wo in range(Wo):
            r0 = n * W * Ci + (2 * wo) * Ci
            c0 = n * Wo * Co + wo * Co
            skipb[r0:r0 + Ci, c0:c0 + Co] = skip_w * ssk[None, :]

    # maxpool row selectors stacked: rows [0:Ho]=2ho, [Ho:2Ho]=2ho+1, [2Ho:3Ho]=2ho-1
    # (ho=0 duplicates row 0: duplicating an in-window element keeps the max exact)
    rsel = np.zeros((3 * Ho, H), np.float32)
    for ho in range(Ho):
        rsel[ho, 2 * ho] = 1.0
        rsel[Ho + ho, 2 * ho + 1] = 1.0
        rsel[2 * Ho + ho, max(2 * ho - 1, 0)] = 1.0

    # maxpool column selectors merged along columns, block-diag over N
    csel = np.zeros((N * W * Co, 3 * N * Wo * Co), np.float32)
    srcs = (lambda wo: 2 * wo, lambda wo: 2 * wo + 1, lambda wo: max(2 * wo - 1, 0))
    for t, src in enumerate(srcs):
        for n in range(N):
            for wo in range(Wo):
                w = src(wo)
                for c in range(Co):
                    csel[n * W * Co + w * Co + c,
                         t * N * Wo * Co + n * Wo * Co + wo * Co + c] = 1.0

    bias1 = np.tile(o1, N * W)[None, :]                 # (1, N*W*Co)  BN1 bias
    bias_out = np.tile(o2 + osk, N * Wo)[None, :]       # (1, N*Wo*Co) BN2+skipBN bias

    return {"b1": jnp.asarray(b1), "b2": jnp.asarray(b2),
            "skipb": jnp.asarray(skipb), "shift": jnp.asarray(shift),
            "csel": jnp.asarray(csel), "rsel": jnp.asarray(rsel),
            "bias1": jnp.asarray(bias1), "bias_out": jnp.asarray(bias_out)}


# ----------------------------------------------------------------------------
# Pure-JAX reference mirroring the PyTorch module (eval-mode BN), NCHW
# ----------------------------------------------------------------------------
def reference_forward(x, tp):
    hp = lax.Precision.HIGHEST

    def bn(h, bnp):
        g, b, m, v = bnp
        bc = lambda t: t[None, :, None, None]
        return (h - bc(m)) / jnp.sqrt(bc(v) + _EPS) * bc(g) + bc(b)

    def sep(h, dw, pw):
        c = h.shape[1]
        h = lax.conv_general_dilated(h, dw, (1, 1), ((1, 1), (1, 1)),
                                     feature_group_count=c,
                                     dimension_numbers=("NCHW", "OIHW", "NCHW"),
                                     precision=hp)
        return lax.conv_general_dilated(h, pw, (1, 1), "VALID",
                                        dimension_numbers=("NCHW", "OIHW", "NCHW"),
                                        precision=hp)

    h = jnp.maximum(x, 0.0)
    h = bn(sep(h, tp["dw1_t"], tp["pw1_t"]), tp["bn1"])
    h = jnp.maximum(h, 0.0)
    h = bn(sep(h, tp["dw2_t"], tp["pw2_t"]), tp["bn2"])
    h = lax.reduce_window(h, -jnp.inf, lax.max, (1, 1, 3, 3), (1, 1, 2, 2),
                          ((0, 0), (0, 0), (1, 1), (1, 1)))
    skip = lax.conv_general_dilated(x, tp["skip_t"], (2, 2), "VALID",
                                    dimension_numbers=("NCHW", "OIHW", "NCHW"),
                                    precision=hp)
    skip = bn(skip, tp["bnskip"])
    return h + skip


# ----------------------------------------------------------------------------
if __name__ == "__main__":
    key = jax.random.PRNGKey(0)
    k_x, k_p = jax.random.split(key)

    N, Cin, H, W = 2, 4, 16, 16          # in_filters=4, out_filters=8, stride=2
    Cout = 8
    x = jax.random.normal(k_x, (N, Cin, H, W), jnp.float32)

    torch_p = init_torch_params(k_p, in_f=Cin, out_f=Cout)
    kern_p = prepare_kernel_params(torch_p, N=N, H=H, W=W, in_f=Cin, out_f=Cout)

    fwd = jax.jit(functools.partial(block_forward, H=H, W=W, in_f=Cin, out_f=Cout))
    out = jax.block_until_ready(fwd(x, kern_p))

    ref = reference_forward(x, torch_p)
    np.testing.assert_allclose(np.asarray(out), np.asarray(ref),
                               rtol=1e-4, atol=1e-4)
    assert out.shape == (N, Cout, H // 2, W // 2)

    print("KERNEL_OK")
</pallas_src>

<mosaic_0001>
module attributes {stable_mosaic.version = 11 : i64} {
  func.func @block_kernel(%arg0: memref<16x128xf32, #tpu.memory_space<vmem>>, %arg1: memref<128x768xf32, #tpu.memory_space<vmem>>, %arg2: memref<256x768xf32, #tpu.memory_space<vmem>>, %arg3: memref<128x128xf32, #tpu.memory_space<vmem>>, %arg4: memref<16x32xf32, #tpu.memory_space<vmem>>, %arg5: memref<256x384xf32, #tpu.memory_space<vmem>>, %arg6: memref<24x16xf32, #tpu.memory_space<vmem>>, %arg7: memref<1x256xf32, #tpu.memory_space<vmem>>, %arg8: memref<1x128xf32, #tpu.memory_space<vmem>>, %arg9: memref<8x128xf32, #tpu.memory_space<vmem>>) attributes {dimension_semantics = [], scalar_prefetch = 0 : i64, scratch_operands = 0 : i64, tpu.core_type = #tpu.core_type<tc>} {
    %c0 = arith.constant 0 : index
    %c0_0 = arith.constant 0 : index
    %0 = vector.load %arg0[%c0, %c0_0] : memref<16x128xf32, #tpu.memory_space<vmem>>, vector<16x128xf32>
    %cst = arith.constant 0.000000e+00 : f32
    %1 = vector.broadcast %cst : f32 to vector<16x128xf32>
    %2 = arith.maximumf %0, %1 : vector<16x128xf32>
    %c0_1 = arith.constant 0 : index
    %c0_2 = arith.constant 0 : index
    %3 = vector.load %arg1[%c0_1, %c0_2] : memref<128x768xf32, #tpu.memory_space<vmem>>, vector<128x768xf32>
    %cst_3 = arith.constant dense<0.000000e+00> : vector<16x768xf32>
    %4 = tpu.matmul %2, %3, %cst_3 {dimension_numbers = #tpu.dot_dimension_numbers<[1], [0], [0], [1], [0, 0, 1, 1], [], []>} : vector<16x128xf32>, vector<128x768xf32>, vector<16x768xf32> -> vector<16x768xf32>
    %5 = vector.extract_strided_slice %4 {offsets = [0, 0], sizes = [16, 256], strides = [1, 1]} : vector<16x768xf32> to vector<16x256xf32>
    %6 = vector.extract_strided_slice %4 {offsets = [0, 256], sizes = [16, 256], strides = [1, 1]} : vector<16x768xf32> to vector<16x256xf32>
    %7 = vector.extract_strided_slice %4 {offsets = [0, 512], sizes = [16, 256], strides = [1, 1]} : vector<16x768xf32> to vector<16x256xf32>
    %8 = tpu.concatenate %5, %7 in 0 : vector<16x256xf32>, vector<16x256xf32> -> vector<32x256xf32>
    %c0_4 = arith.constant 0 : index
    %c0_5 = arith.constant 0 : index
    %9 = vector.load %arg4[%c0_4, %c0_5] : memref<16x32xf32, #tpu.memory_space<vmem>>, vector<16x32xf32>
    %cst_6 = arith.constant dense<0.000000e+00> : vector<16x256xf32>
    %10 = tpu.matmul %9, %8, %cst_6 {dimension_numbers = #tpu.dot_dimension_numbers<[1], [0], [0], [1], [0, 0, 1, 1], [], []>} : vector<16x32xf32>, vector<32x256xf32>, vector<16x256xf32> -> vector<16x256xf32>
    %11 = arith.addf %6, %10 : vector<16x256xf32>
    %c0_7 = arith.constant 0 : index
    %c0_8 = arith.constant 0 : index
    %12 = vector.load %arg7[%c0_7, %c0_8] : memref<1x256xf32, #tpu.memory_space<vmem>>, vector<1x256xf32>
    %13 = vector.broadcast %12 : vector<1x256xf32> to vector<16x256xf32>
    %14 = arith.addf %11, %13 : vector<16x256xf32>
    %cst_9 = arith.constant 0.000000e+00 : f32
    %15 = vector.broadcast %cst_9 : f32 to vector<16x256xf32>
    %16 = arith.maximumf %14, %15 : vector<16x256xf32>
    %c0_10 = arith.constant 0 : index
    %c0_11 = arith.constant 0 : index
    %17 = vector.load %arg2[%c0_10, %c0_11] : memref<256x768xf32, #tpu.memory_space<vmem>>, vector<256x768xf32>
    %cst_12 = arith.constant dense<0.000000e+00> : vector<16x768xf32>
    %18 = tpu.matmul %16, %17, %cst_12 {dimension_numbers = #tpu.dot_dimension_numbers<[1], [0], [0], [1], [0, 0, 1, 1], [], []>} : vector<16x256xf32>, vector<256x768xf32>, vector<16x768xf32> -> vector<16x768xf32>
    %19 = vector.extract_strided_slice %18 {offsets = [0, 0], sizes = [16, 256], strides = [1, 1]} : vector<16x768xf32> to vector<16x256xf32>
    %20 = vector.extract_strided_slice %18 {offsets = [0, 256], sizes = [16, 256], strides = [1, 1]} : vector<16x768xf32> to vector<16x256xf32>
    %21 = vector.extract_strided_slice %18 {offsets = [0, 512], sizes = [16, 256], strides = [1, 1]} : vector<16x768xf32> to vector<16x256xf32>
    %22 = tpu.concatenate %19, %21 in 0 : vector<16x256xf32>, vector<16x256xf32> -> vector<32x256xf32>
    %c0_13 = arith.constant 0 : index
    %c0_14 = arith.constant 0 : index
    %23 = vector.load %arg4[%c0_13, %c0_14] : memref<16x32xf32, #tpu.memory_space<vmem>>, vector<16x32xf32>
    %cst_15 = arith.constant dense<0.000000e+00> : vector<16x256xf32>
    %24 = tpu.matmul %23, %22, %cst_15 {dimension_numbers = #tpu.dot_dimension_numbers<[1], [0], [0], [1], [0, 0, 1, 1], [], []>} : vector<16x32xf32>, vector<32x256xf32>, vector<16x256xf32> -> vector<16x256xf32>
    %25 = arith.addf %20, %24 : vector<16x256xf32>
    %c0_16 = arith.constant 0 : index
    %c0_17 = arith.constant 0 : index
    %26 = vector.load %arg6[%c0_16, %c0_17] : memref<24x16xf32, #tpu.memory_space<vmem>>, vector<24x16xf32>
    %cst_18 = arith.constant dense<0.000000e+00> : vector<24x256xf32>
    %27 = tpu.matmul %26, %25, %cst_18 {dimension_numbers = #tpu.dot_dimension_numbers<[1], [0], [0], [1], [0, 0, 1, 1], [], []>} : vector<24x16xf32>, vector<16x256xf32>, vector<24x256xf32> -> vector<24x256xf32>
    %28 = vector.extract_strided_slice %27 {offsets = [0, 0], sizes = [8, 256], strides = [1, 1]} : vector<24x256xf32> to vector<8x256xf32>
    %29 = vector.extract_strided_slice %27 {offsets = [8, 0], sizes = [8, 256], strides = [1, 1]} : vector<24x256xf32> to vector<8x256xf32>
    %30 = arith.maximumf %28, %29 : vector<8x256xf32>
    %31 = vector.extract_strided_slice %27 {offsets = [16, 0], sizes = [8, 256], strides = [1, 1]} : vector<24x256xf32> to vector<8x256xf32>
    %32 = arith.maximumf %30, %31 : vector<8x256xf32>
    %c0_19 = arith.constant 0 : index
    %c0_20 = arith.constant 0 : index
    %33 = vector.load %arg5[%c0_19, %c0_20] : memref<256x384xf32, #tpu.memory_space<vmem>>, vector<256x384xf32>
    %cst_21 = arith.constant dense<0.000000e+00> : vector<8x384xf32>
    %34 = tpu.matmul %32, %33, %cst_21 {dimension_numbers = #tpu.dot_dimension_numbers<[1], [0], [0], [1], [0, 0, 1, 1], [], []>} : vector<8x256xf32>, vector<256x384xf32>, vector<8x384xf32> -> vector<8x384xf32>
    %35 = vector.extract_strided_slice %34 {offsets = [0, 0], sizes = [8, 128], strides = [1, 1]} : vector<8x384xf32> to vector<8x128xf32>
    %36 = vector.extract_strided_slice %34 {offsets = [0, 128], sizes = [8, 128], strides = [1, 1]} : vector<8x384xf32> to vector<8x128xf32>
    %37 = arith.maximumf %35, %36 : vector<8x128xf32>
    %38 = vector.extract_strided_slice %34 {offsets = [0, 256], sizes = [8, 128], strides = [1, 1]} : vector<8x384xf32> to vector<8x128xf32>
    %39 = arith.maximumf %37, %38 : vector<8x128xf32>
    %c0_22 = arith.constant 0 : index
    %c0_23 = arith.constant 0 : index
    %40 = vector.load %arg6[%c0_22, %c0_23] : memref<24x16xf32, #tpu.memory_space<vmem>>, vector<8x16xf32>
    %cst_24 = arith.constant dense<0.000000e+00> : vector<8x128xf32>
    %41 = tpu.matmul %40, %0, %cst_24 {dimension_numbers = #tpu.dot_dimension_numbers<[1], [0], [0], [1], [0, 0, 1, 1], [], []>} : vector<8x16xf32>, vector<16x128xf32>, vector<8x128xf32> -> vector<8x128xf32>
    %c0_25 = arith.constant 0 : index
    %c0_26 = arith.constant 0 : index
    %42 = vector.load %arg3[%c0_25, %c0_26] : memref<128x128xf32, #tpu.memory_space<vmem>>, vector<128x128xf32>
    %cst_27 = arith.constant dense<0.000000e+00> : vector<8x128xf32>
    %43 = tpu.matmul %41, %42, %cst_27 {dimension_numbers = #tpu.dot_dimension_numbers<[1], [0], [0], [1], [0, 0, 1, 1], [], []>} : vector<8x128xf32>, vector<128x128xf32>, vector<8x128xf32> -> vector<8x128xf32>
    %44 = arith.addf %39, %43 : vector<8x128xf32>
    %c0_28 = arith.constant 0 : index
    %c0_29 = arith.constant 0 : index
    %45 = vector.load %arg8[%c0_28, %c0_29] : memref<1x128xf32, #tpu.memory_space<vmem>>, vector<1x128xf32>
    %46 = vector.broadcast %45 : vector<1x128xf32> to vector<8x128xf32>
    %47 = arith.addf %44, %46 : vector<8x128xf32>
    %c0_30 = arith.constant 0 : index
    %c0_31 = arith.constant 0 : index
    %48 = vector.load %arg9[%c0_30, %c0_31] : memref<8x128xf32, #tpu.memory_space<vmem>>, vector<8x128xf32>
    tpu.vector_store %arg9[%c0_30, %c0_31], %47 {strides = array<i32>} : memref<8x128xf32, #tpu.memory_space<vmem>>, vector<8x128xf32>,
    return
  }
}

</mosaic_0001>

<llo_original>
// kernel: block_forward.1
$region0: #{block_forward.1}
  #allocation0 [shape = 'u32[]', space=smem, size = 0x4, offset = 0x4, fixed_abs, tag = 'smem constant byte address 0x4 - core index']
  #allocation1 [shape = 'u32[144,128]{1,0:T(1,128)}', space=vmem, size = 0x12000, scoped, tag = 'internal scratch']
  %s0 = inlined_call_operand.vmem [shape: f32[16,128], index: 0, kind: input, shape index: {}]
  %s1 = inlined_call_operand.hbm [shape: f32[128,768], index: 1, kind: input, shape index: {}]
  %s2 = inlined_call_operand.hbm [shape: f32[256,768], index: 2, kind: input, shape index: {}]
  %s3 = inlined_call_operand.vmem [shape: f32[128,128], index: 3, kind: input, shape index: {}]
  %s4 = inlined_call_operand.vmem [shape: f32[16,32], index: 4, kind: input, shape index: {}]
  %s5 = inlined_call_operand.hbm [shape: f32[256,384], index: 5, kind: input, shape index: {}]
  %s6 = inlined_call_operand.vmem [shape: f32[24,16], index: 6, kind: input, shape index: {}]
  %s7 = inlined_call_operand.vmem [shape: f32[1,256], index: 7, kind: input, shape index: {}]
  %s8 = inlined_call_operand.vmem [shape: f32[1,128], index: 8, kind: input, shape index: {}]
  %s9 = inlined_call_operand.vmem [shape: f32[8,128], index: 9, kind: output, shape index: {}]
  %s10 = sld [smem:[#allocation0]]
  $region58: #{block_forward.1} parent=0
    _
  %s12 = ssub.s32 1, %s10
  %s13 = scalar_select 0, %s12, %s10
  $region1: #{block_forward.1} parent=0
    #allocation2 [shape = 'u8[393216]{0}', space=vmem, size = 0x60000, scoped, tag = 'input window, operand 1, single buffered']
    #allocation3 [shape = 's32[1]{0}', space=sflag, size = 0x4, scoped, tag = 'scoped memory for block_forward.1']
    #allocation4 [shape = 'u8[786432]{0}', space=vmem, size = 0xc0000, scoped, tag = 'input window, operand 2, single buffered']
    #allocation5 [shape = 's32[1]{0}', space=sflag, size = 0x4, scoped, tag = 'scoped memory for block_forward.1']
    #allocation6 [shape = 'u8[393216]{0}', space=vmem, size = 0x60000, scoped, tag = 'input window, operand 5, single buffered']
    %14 = vsyncpa [#allocation3], 0
    %15 = vsyncpa [#allocation5], 0
    // Predicated region
    $region2: #{block_forward.1} parent=1 // pred_check
      _
    $region3: #{block_forward.1} parent=1 // pred_check_branch
      %17 = sbr.rel (0) target = $region5
    $region4: #{block_forward.1} parent=1 // pred_region
      _
    $region5: #{block_forward.1} parent=1 // pred_fallthru
      _
    // Predicated region
    $region6: #{block_forward.1} parent=1 // pred_check
      _
    $region7: #{block_forward.1} parent=1 // pred_check_branch
      %19 = sbr.rel (0) target = $region9
    $region8: #{block_forward.1} parent=1 // pred_region
      %s21 = ssub.s32 12288, 12288
      %22 = vsyncadd [#allocation3], %s21
      %s23 = sshll.u32 [#allocation2], 4
      %s24 = int_to_ptr.vmem [resolvable:$true] %s23
      %29 = dma.hbm_to_vmem [thread:$0]  %s1, 12288, %s24, [#allocation3], 768, 768, 48
    $region9: #{block_forward.1} parent=1 // pred_fallthru
      _
    // Predicated region
    $region10: #{block_forward.1} parent=1 // pred_check
      _
    $region11: #{block_forward.1} parent=1 // pred_check_branch
      %31 = sbr.rel (0) target = $region13
    $region12: #{block_forward.1} parent=1 // pred_region
      %s33 = ssub.s32 24576, 24576
      %34 = vsyncadd [#allocation5], %s33
      %s35 = sshll.u32 [#allocation4], 4
      %s36 = int_to_ptr.vmem [resolvable:$true] %s35
      %41 = dma.hbm_to_vmem [thread:$0]  %s2, 24576, %s36, [#allocation5], 768, 768, 48
    $region13: #{block_forward.1} parent=1 // pred_fallthru
      _
    // Predicated region
    $region14: #{block_forward.1} parent=1 // pred_check
      _
    $region15: #{block_forward.1} parent=1 // pred_check_branch
      %43 = sbr.rel (0) target = $region17
    $region16: #{block_forward.1} parent=1 // pred_region
      _
    $region17: #{block_forward.1} parent=1 // pred_fallthru
      _
    // Predicated region
    $region18: #{block_forward.1} parent=1 // pred_check
      _
    $region19: #{block_forward.1} parent=1 // pred_check_branch
      %45 = sbr.rel (0) target = $region21
    $region20: #{block_forward.1} parent=1 // pred_region
      _
    $region21: #{block_forward.1} parent=1 // pred_fallthru
      _
    // Predicated region
    $region22: #{block_forward.1} parent=1 // pred_check
      _
    $region23: #{block_forward.1} parent=1 // pred_check_branch
      %47 = sbr.rel (0) target = $region25
    $region24: #{block_forward.1} parent=1 // pred_region
      %s49 = ssub.s32 12288, 12288
      %50 = vsyncadd [#allocation5], %s49
      %s51 = sshll.u32 [#allocation6], 4
      %s52 = int_to_ptr.vmem [resolvable:$true] %s51
      %57 = dma.hbm_to_vmem [thread:$0]  %s5, 12288, %s52, [#allocation5], 384, 384, 24
    $region25: #{block_forward.1} parent=1 // pred_fallthru
      _
    // Predicated region
    $region26: #{block_forward.1} parent=1 // pred_check
      _
    $region27: #{block_forward.1} parent=1 // pred_check_branch
      %59 = sbr.rel (0) target = $region29
    $region28: #{block_forward.1} parent=1 // pred_region
      _
    $region29: #{block_forward.1} parent=1 // pred_fallthru
      _
    // Predicated region
    $region30: #{block_forward.1} parent=1 // pred_check
      _
    $region31: #{block_forward.1} parent=1 // pred_check_branch
      %61 = sbr.rel (0) target = $region33
    $region32: #{block_forward.1} parent=1 // pred_region
      _
    $region33: #{block_forward.1} parent=1 // pred_fallthru
      _
    // Predicated region
    $region34: #{block_forward.1} parent=1 // pred_check
      _
    $region35: #{block_forward.1} parent=1 // pred_check_branch
      %63 = sbr.rel (0) target = $region37
    $region36: #{block_forward.1} parent=1 // pred_region
      _
    $region37: #{block_forward.1} parent=1 // pred_fallthru
      _
    // Predicated region
    $region38: #{block_forward.1} parent=1 // pred_check
      _
    $region39: #{block_forward.1} parent=1 // pred_check_branch
      %65 = sbr.rel (0) target = $region41
    $region40: #{block_forward.1} parent=1 // pred_region
      %66 = dma.done [#allocation3], 12288
    $region41: #{block_forward.1} parent=1 // pred_fallthru
      _
    // Predicated region
    $region42: #{block_forward.1} parent=1 // pred_check
      _
    $region43: #{block_forward.1} parent=1 // pred_check_branch
      %68 = sbr.rel (0) target = $region45
    $region44: #{block_forward.1} parent=1 // pred_region
      %69 = dma.done [#allocation5], 24576
    $region45: #{block_forward.1} parent=1 // pred_fallthru
      _
    // Predicated region
    $region46: #{block_forward.1} parent=1 // pred_check
      _
    $region47: #{block_forward.1} parent=1 // pred_check_branch
      %71 = sbr.rel (0) target = $region49
    $region48: #{block_forward.1} parent=1 // pred_region
      %72 = dma.done [#allocation5], 12288
    $region49: #{block_forward.1} parent=1 // pred_fallthru
      _
    %v73 = vld [vmem:[%s0] sm:$0xff]
    %v74 = vld [vmem:[%s0 + $0x8] sm:$0xff]
    %v75 = vmax.f32 %v73, 0.0
    %v76 = vmax.f32 %v74, 0.0
    %v77 = vld [vmem:[#allocation2] sm:$0xff]
    %v78 = vld [vmem:[#allocation2 + $0x8] sm:$0xff]
    %v79 = vld [vmem:[#allocation2 + $0x10] sm:$0xff]
    %v80 = vld [vmem:[#allocation2 + $0x18] sm:$0xff]
    %v81 = vld [vmem:[#allocation2 + $0x20] sm:$0xff]
    %v82 = vld [vmem:[#allocation2 + $0x28] sm:$0xff]
    %v83 = vld [vmem:[#allocation2 + $0x30] sm:$0xff]
    %v84 = vld [vmem:[#allocation2 + $0x38] sm:$0xff]
    %v85 = vld [vmem:[#allocation2 + $0x40] sm:$0xff]
    %v86 = vld [vmem:[#allocation2 + $0x48] sm:$0xff]
    %v87 = vld [vmem:[#allocation2 + $0x50] sm:$0xff]
    %v88 = vld [vmem:[#allocation2 + $0x58] sm:$0xff]
    %v89 = vld [vmem:[#allocation2 + $0x60] sm:$0xff]
    %v90 = vld [vmem:[#allocation2 + $0x68] sm:$0xff]
    %v91 = vld [vmem:[#allocation2 + $0x70] sm:$0xff]
    %v92 = vld [vmem:[#allocation2 + $0x78] sm:$0xff]
    %v93 = vld [vmem:[#allocation2 + $0x80] sm:$0xff]
    %v94 = vld [vmem:[#allocation2 + $0x88] sm:$0xff]
    %v95 = vld [vmem:[#allocation2 + $0x90] sm:$0xff]
    %v96 = vld [vmem:[#allocation2 + $0x98] sm:$0xff]
    %v97 = vld [vmem:[#allocation2 + $0xa0] sm:$0xff]
    %v98 = vld [vmem:[#allocation2 + $0xa8] sm:$0xff]
    %v99 = vld [vmem:[#allocation2 + $0xb0] sm:$0xff]
    %v100 = vld [vmem:[#allocation2 + $0xb8] sm:$0xff]
    %v101 = vld [vmem:[#allocation2 + $0xc0] sm:$0xff]
    %v102 = vld [vmem:[#allocation2 + $0xc8] sm:$0xff]
    %v103 = vld [vmem:[#allocation2 + $0xd0] sm:$0xff]
    %v104 = vld [vmem:[#allocation2 + $0xd8] sm:$0xff]
    %v105 = vld [vmem:[#allocation2 + $0xe0] sm:$0xff]
    %v106 = vld [vmem:[#allocation2 + $0xe8] sm:$0xff]
    %v107 = vld [vmem:[#allocation2 + $0xf0] sm:$0xff]
    %v108 = vld [vmem:[#allocation2 + $0xf8] sm:$0xff]
    %v109 = vld [vmem:[#allocation2 + $0x100] sm:$0xff]
    %v110 = vld [vmem:[#allocation2 + $0x108] sm:$0xff]
    %v111 = vld [vmem:[#allocation2 + $0x110] sm:$0xff]
    %v112 = vld [vmem:[#allocation2 + $0x118] sm:$0xff]
    %v113 = vld [vmem:[#allocation2 + $0x120] sm:$0xff]
    %v114 = vld [vmem:[#allocation2 + $0x128] sm:$0xff]
    %v115 = vld [vmem:[#allocation2 + $0x130] sm:$0xff]
    %v116 = vld [vmem:[#allocation2 + $0x138] sm:$0xff]
    %v117 = vld [vmem:[#allocation2 + $0x140] sm:$0xff]
    %v118 = vld [vmem:[#allocation2 + $0x148] sm:$0xff]
    %v119 = vld [vmem:[#allocation2 + $0x150] sm:$0xff]
    %v120 = vld [vmem:[#allocation2 + $0x158] sm:$0xff]
    %v121 = vld [vmem:[#allocation2 + $0x160] sm:$0xff]
    %v122 = vld [vmem:[#allocation2 + $0x168] sm:$0xff]
    %v123 = vld [vmem:[#allocation2 + $0x170] sm:$0xff]
    %v124 = vld [vmem:[#allocation2 + $0x178] sm:$0xff]
    %v125 = vld [vmem:[#allocation2 + $0x180] sm:$0xff]
    %v126 = vld [vmem:[#allocation2 + $0x188] sm:$0xff]
    %v127 = vld [vmem:[#allocation2 + $0x190] sm:$0xff]
    %v128 = vld [vmem:[#allocation2 + $0x198] sm:$0xff]
    %v129 = vld [vmem:[#allocation2 + $0x1a0] sm:$0xff]
    %v130 = vld [vmem:[#allocation2 + $0x1a8] sm:$0xff]
    %v131 = vld [vmem:[#allocation2 + $0x1b0] sm:$0xff]
    %v132 = vld [vmem:[#allocation2 + $0x1b8] sm:$0xff]
    %v133 = vld [vmem:[#allocation2 + $0x1c0] sm:$0xff]
    %v134 = vld [vmem:[#allocation2 + $0x1c8] sm:$0xff]
    %v135 = vld [vmem:[#allocation2 + $0x1d0] sm:$0xff]
    %v136 = vld [vmem:[#allocation2 + $0x1d8] sm:$0xff]
    %v137 = vld [vmem:[#allocation2 + $0x1e0] sm:$0xff]
    %v138 = vld [vmem:[#allocation2 + $0x1e8] sm:$0xff]
    %v139 = vld [vmem:[#allocation2 + $0x1f0] sm:$0xff]
    %v140 = vld [vmem:[#allocation2 + $0x1f8] sm:$0xff]
    %v141 = vld [vmem:[#allocation2 + $0x200] sm:$0xff]
    %v142 = vld [vmem:[#allocation2 + $0x208] sm:$0xff]
    %v143 = vld [vmem:[#allocation2 + $0x210] sm:$0xff]
    %v144 = vld [vmem:[#allocation2 + $0x218] sm:$0xff]
    %v145 = vld [vmem:[#allocation2 + $0x220] sm:$0xff]
    %v146 = vld [vmem:[#allocation2 + $0x228] sm:$0xff]
    %v147 = vld [vmem:[#allocation2 + $0x230] sm:$0xff]
    %v148 = vld [vmem:[#allocation2 + $0x238] sm:$0xff]
    %v149 = vld [vmem:[#allocation2 + $0x240] sm:$0xff]
    %v150 = vld [vmem:[#allocation2 + $0x248] sm:$0xff]
    %v151 = vld [vmem:[#allocation2 + $0x250] sm:$0xff]
    %v152 = vld [vmem:[#allocation2 + $0x258] sm:$0xff]
    %v153 = vld [vmem:[#allocation2 + $0x260] sm:$0xff]
    %v154 = vld [vmem:[#allocation2 + $0x268] sm:$0xff]
    %v155 = vld [vmem:[#allocation2 + $0x270] sm:$0xff]
    %v156 = vld [vmem:[#allocation2 + $0x278] sm:$0xff]
    %v157 = vld [vmem:[#allocation2 + $0x280] sm:$0xff]
    %v158 = vld [vmem:[#allocation2 + $0x288] sm:$0xff]
    %v159 = vld [vmem:[#allocation2 + $0x290] sm:$0xff]
    %v160 = vld [vmem:[#allocation2 + $0x298] sm:$0xff]
    %v161 = vld [vmem:[#allocation2 + $0x2a0] sm:$0xff]
    %v162 = vld [vmem:[#allocation2 + $0x2a8] sm:$0xff]
    %v163 = vld [vmem:[#allocation2 + $0x2b0] sm:$0xff]
    %v164 = vld [vmem:[#allocation2 + $0x2b8] sm:$0xff]
    %v165 = vld [vmem:[#allocation2 + $0x2c0] sm:$0xff]
    %v166 = vld [vmem:[#allocation2 + $0x2c8] sm:$0xff]
    %v167 = vld [vmem:[#allocation2 + $0x2d0] sm:$0xff]
    %v168 = vld [vmem:[#allocation2 + $0x2d8] sm:$0xff]
    %v169 = vld [vmem:[#allocation2 + $0x2e0] sm:$0xff]
    %v170 = vld [vmem:[#allocation2 + $0x2e8] sm:$0xff]
    %v171 = vld [vmem:[#allocation2 + $0x2f0] sm:$0xff]
    %v172 = vld [vmem:[#allocation2 + $0x2f8] sm:$0xff]
    %173 = vmatprep.subr.mxu0 %v78
    %174 = vmatpush1.msra.mxu0 %v77
    %175 = vmatprep.subr.mxu0 %v84
    %176 = vmatpush1.msra.mxu0 %v83
    %177 = vmatprep.subr.mxu0 %v90
    %178 = vmatpush1.msra.mxu0 %v89
    %179 = vmatprep.subr.mxu0 %v96
    %180 = vmatpush1.msra.mxu0 %v95
    %181 = vmatprep.subr.mxu0 %v102
    %182 = vmatpush1.msra.mxu0 %v101
    %183 = vmatprep.subr.mxu0 %v108
    %184 = vmatpush1.msra.mxu0 %v107
    %185 = vmatprep.subr.mxu0 %v114
    %186 = vmatpush1.msra.mxu0 %v113
    %187 = vmatprep.subr.mxu0 %v120
    %188 = vmatpush1.msra.mxu0 %v119
    %189 = vmatprep.subr.mxu0 %v126
    %190 = vmatpush1.msra.mxu0 %v125
    %191 = vmatprep.subr.mxu0 %v132
    %192 = vmatpush1.msra.mxu0 %v131
    %193 = vmatprep.subr.mxu0 %v138
    %194 = vmatpush1.msra.mxu0 %v137
    %195 = vmatprep.subr.mxu0 %v144
    %196 = vmatpush1.msra.mxu0 %v143
    %197 = vmatprep.subr.mxu0 %v150
    %198 = vmatpush1.msra.mxu0 %v149
    %199 = vmatprep.subr.mxu0 %v156
    %200 = vmatpush1.msra.mxu0 %v155
    %201 = vmatprep.subr.mxu0 %v162
    %202 = vmatpush1.msra.mxu0 %v161
    %203 = vmatprep.subr.mxu0 %v168
    %204 = vmatpush1.msra.mxu0 %v167
    %205 = vmatprep.subr.mxu0 0.0
    %206 = vmatpush1.msra.mxu0 0.0
    %207 = vmatprep.subr.mxu0 0.0
    %208 = vmatpush1.msra.mxu0 0.0
    %209 = vmatprep.subr.mxu0 0.0
    %210 = vmatpush1.msra.mxu0 0.0
    %211 = vmatprep.subr.mxu0 0.0
    %212 = vmatpush1.msra.mxu0 0.0
    %213 = vmatprep.subr.mxu0 0.0
    %214 = vmatpush1.msra.mxu0 0.0
    %215 = vmatprep.subr.mxu0 0.0
    %216 = vmatpush1.msra.mxu0 0.0
    %217 = vmatprep.subr.mxu0 0.0
    %218 = vmatpush1.msra.mxu0 0.0
    %219 = vmatprep.subr.mxu0 0.0
    %220 = vmatpush1.msra.mxu0 0.0
    %221 = vmatprep.subr.mxu0 0.0
    %222 = vmatpush1.msra.mxu0 0.0
    %223 = vmatprep.subr.mxu0 0.0
    %224 = vmatpush1.msra.mxu0 0.0
    %225 = vmatprep.subr.mxu0 0.0
    %226 = vmatpush1.msra.mxu0 0.0
    %227 = vmatprep.subr.mxu0 0.0
    %228 = vmatpush1.msra.mxu0 0.0
    %229 = vmatprep.subr.mxu0 0.0
    %230 = vmatpush1.msra.mxu0 0.0
    %231 = vmatprep.subr.mxu0 0.0
    %232 = vmatpush1.msra.mxu0 0.0
    %233 = vmatprep.subr.mxu0 0.0
    %234 = vmatpush1.msra.mxu0 0.0
    %235 = vmatprep.subr.mxu0 0.0
    %236 = vmatpush1.msra.mxu0 0.0
    %237 = vmatprep.mubr.f32.mxu0 0.0
    %238 = vmatmul.mubr.f32.gmra.mrb[0].mxu0 %v75
    %v239 = vpop.f32.mrb[0].mxu0
    %v240 = vadd.f32 0.0, %v239
    %v241 = vpop.f32.mrb[0].mxu0
    %v242 = vadd.f32 0.0, %v241
    %243 = vmatprep.mubr.f32.mxu0 0.0
    %244 = vmatmul.mubr.f32.gmra.mrb[0].mxu0 %v76
    %v245 = vpop.f32.mrb[0].mxu0
    %v246 = vadd.f32 0.0, %v245
    %v247 = vpop.f32.mrb[0].mxu0
    %v248 = vadd.f32 0.0, %v247
    %249 = vdwg.mxu0
    %250 = vmatprep.subr.mxu0 %v80
    %251 = vmatpush1.msra.mxu0 %v79
    %252 = vmatprep.subr.mxu0 %v86
    %253 = vmatpush1.msra.mxu0 %v85
    %254 = vmatprep.subr.mxu0 %v92
    %255 = vmatpush1.msra.mxu0 %v91
    %256 = vmatprep.subr.mxu0 %v98
    %257 = vmatpush1.msra.mxu0 %v97
    %258 = vmatprep.subr.mxu0 %v104
    %259 = vmatpush1.msra.mxu0 %v103
    %260 = vmatprep.subr.mxu0 %v110
    %261 = vmatpush1.msra.mxu0 %v109
    %262 = vmatprep.subr.mxu0 %v116
    %263 = vmatpush1.msra.mxu0 %v115
    %264 = vmatprep.subr.mxu0 %v122
    %265 = vmatpush1.msra.mxu0 %v121
    %266 = vmatprep.subr.mxu0 %v128
    %267 = vmatpush1.msra.mxu0 %v127
    %268 = vmatprep.subr.mxu0 %v134
    %269 = vmatpush1.msra.mxu0 %v133
    %270 = vmatprep.subr.mxu0 %v140
    %271 = vmatpush1.msra.mxu0 %v139
    %272 = vmatprep.subr.mxu0 %v146
    %273 = vmatpush1.msra.mxu0 %v145
    %274 = vmatprep.subr.mxu0 %v152
    %275 = vmatpush1.msra.mxu0 %v151
    %276 = vmatprep.subr.mxu0 %v158
    %277 = vmatpush1.msra.mxu0 %v157
    %278 = vmatprep.subr.mxu0 %v164
    %279 = vmatpush1.msra.mxu0 %v163
    %280 = vmatprep.subr.mxu0 %v170
    %281 = vmatpush1.msra.mxu0 %v169
    %282 = vmatprep.subr.mxu0 0.0
    %283 = vmatpush1.msra.mxu0 0.0
    %284 = vmatprep.subr.mxu0 0.0
    %285 = vmatpush1.msra.mxu0 0.0
    %286 = vmatprep.subr.mxu0 0.0
    %287 = vmatpush1.msra.mxu0 0.0
    %288 = vmatprep.subr.mxu0 0.0
    %289 = vmatpush1.msra.mxu0 0.0
    %290 = vmatprep.subr.mxu0 0.0
    %291 = vmatpush1.msra.mxu0 0.0
    %292 = vmatprep.subr.mxu0 0.0
    %293 = vmatpush1.msra.mxu0 0.0
    %294 = vmatprep.subr.mxu0 0.0
    %295 = vmatpush1.msra.mxu0 0.0
    %296 = vmatprep.subr.mxu0 0.0
    %297 = vmatpush1.msra.mxu0 0.0
    %298 = vmatprep.subr.mxu0 0.0
    %299 = vmatpush1.msra.mxu0 0.0
    %300 = vmatprep.subr.mxu0 0.0
    %301 = vmatpush1.msra.mxu0 0.0
    %302 = vmatprep.subr.mxu0 0.0
    %303 = vmatpush1.msra.mxu0 0.0
    %304 = vmatprep.subr.mxu0 0.0
    %305 = vmatpush1.msra.mxu0 0.0
    %306 = vmatprep.subr.mxu0 0.0
    %307 = vmatpush1.msra.mxu0 0.0
    %308 = vmatprep.subr.mxu0 0.0
    %309 = vmatpush1.msra.mxu0 0.0
    %310 = vmatprep.subr.mxu0 0.0
    %311 = vmatpush1.msra.mxu0 0.0
    %312 = vmatprep.subr.mxu0 0.0
    %313 = vmatpush1.msra.mxu0 0.0
    %314 = vmatprep.mubr.f32.mxu0 0.0
    %315 = vmatmul.mubr.f32.gmra.mrb[0].mxu0 %v75
    %v316 = vpop.f32.mrb[0].mxu0
    %v317 = vadd.f32 0.0, %v316
    %v318 = vpop.f32.mrb[0].mxu0
    %v319 = vadd.f32 0.0, %v318
    %320 = vmatprep.mubr.f32.mxu0 0.0
    %321 = vmatmul.mubr.f32.gmra.mrb[0].mxu0 %v76
    %v322 = vpop.f32.mrb[0].mxu0
    %v323 = vadd.f32 0.0, %v322
    %v324 = vpop.f32.mrb[0].mxu0
    %v325 = vadd.f32 0.0, %v324
    %326 = vdwg.mxu0
    %327 = vmatprep.subr.mxu0 %v82
    %328 = vmatpush1.msra.mxu0 %v81
    %329 = vmatprep.subr.mxu0 %v88
    %330 = vmatpush1.msra.mxu0 %v87
    %331 = vmatprep.subr.mxu0 %v94
    %332 = vmatpush1.msra.mxu0 %v93
    %333 = vmatprep.subr.mxu0 %v100
    %334 = vmatpush1.msra.mxu0 %v99
    %335 = vmatprep.subr.mxu0 %v106
    %336 = vmatpush1.msra.mxu0 %v105
    %337 = vmatprep.subr.mxu0 %v112
    %338 = vmatpush1.msra.mxu0 %v111
    %339 = vmatprep.subr.mxu0 %v118
    %340 = vmatpush1.msra.mxu0 %v117
    %341 = vmatprep.subr.mxu0 %v124
    %342 = vmatpush1.msra.mxu0 %v123
    %343 = vmatprep.subr.mxu0 %v130
    %344 = vmatpush1.msra.mxu0 %v129
    %345 = vmatprep.subr.mxu0 %v136
    %346 = vmatpush1.msra.mxu0 %v135
    %347 = vmatprep.subr.mxu0 %v142
    %348 = vmatpush1.msra.mxu0 %v141
    %349 = vmatprep.subr.mxu0 %v148
    %350 = vmatpush1.msra.mxu0 %v147
    %351 = vmatprep.subr.mxu0 %v154
    %352 = vmatpush1.msra.mxu0 %v153
    %353 = vmatprep.subr.mxu0 %v160
    %354 = vmatpush1.msra.mxu0 %v159
    %355 = vmatprep.subr.mxu0 %v166
    %356 = vmatpush1.msra.mxu0 %v165
    %357 = vmatprep.subr.mxu0 %v172
    %358 = vmatpush1.msra.mxu0 %v171
    %359 = vmatprep.subr.mxu0 0.0
    %360 = vmatpush1.msra.mxu0 0.0
    %361 = vmatprep.subr.mxu0 0.0
    %362 = vmatpush1.msra.mxu0 0.0
    %363 = vmatprep.subr.mxu0 0.0
    %364 = vmatpush1.msra.mxu0 0.0
    %365 = vmatprep.subr.mxu0 0.0
    %366 = vmatpush1.msra.mxu0 0.0
    %367 = vmatprep.subr.mxu0 0.0
    %368 = vmatpush1.msra.mxu0 0.0
    %369 = vmatprep.subr.mxu0 0.0
    %370 = vmatpush1.msra.mxu0 0.0
    %371 = vmatprep.subr.mxu0 0.0
    %372 = vmatpush1.msra.mxu0 0.0
    %373 = vmatprep.subr.mxu0 0.0
    %374 = vmatpush1.msra.mxu0 0.0
    %375 = vmatprep.subr.mxu0 0.0
    %376 = vmatpush1.msra.mxu0 0.0
    %377 = vmatprep.subr.mxu0 0.0
    %378 = vmatpush1.msra.mxu0 0.0
    %379 = vmatprep.subr.mxu0 0.0
    %380 = vmatpush1.msra.mxu0 0.0
    %381 = vmatprep.subr.mxu0 0.0
    %382 = vmatpush1.msra.mxu0 0.0
    %383 = vmatprep.subr.mxu0 0.0
    %384 = vmatpush1.msra.mxu0 0.0
    %385 = vmatprep.subr.mxu0 0.0
    %386 = vmatpush1.msra.mxu0 0.0
    %387 = vmatprep.subr.mxu0 0.0
    %388 = vmatpush1.msra.mxu0 0.0
    %389 = vmatprep.subr.mxu0 0.0
    %390 = vmatpush1.msra.mxu0 0.0
    %391 = vmatprep.mubr.f32.mxu0 0.0
    %392 = vmatmul.mubr.f32.gmra.mrb[0].mxu0 %v75
    %v393 = vpop.f32.mrb[0].mxu0
    %v394 = vadd.f32 0.0, %v393
    %v395 = vpop.f32.mrb[0].mxu0
    %v396 = vadd.f32 0.0, %v395
    %397 = vmatprep.mubr.f32.mxu0 0.0
    %398 = vmatmul.mubr.f32.gmra.mrb[0].mxu0 %v76
    %v399 = vpop.f32.mrb[0].mxu0
    %v400 = vadd.f32 0.0, %v399
    %v401 = vpop.f32.mrb[0].mxu0
    %v402 = vadd.f32 0.0, %v401
    %403 = vdwg.mxu0
    %v404 = vld [vmem:[%s4] sm:$0xff]
    %v405 = vld [vmem:[%s4 + $0x8] sm:$0xff]
    %vm406 = vcmask 261120
    %v408 = vsel %vm406, %v404, 0
    %v411 = vsel %vm406, %v405, 0
    %413 = vmatprep.subr.mxu0 %v242
    %414 = vmatpush1.msra.mxu0 %v240
    %415 = vmatprep.subr.mxu0 %v248
    %416 = vmatpush1.msra.mxu0 %v246
    %417 = vmatprep.subr.mxu0 %v396
    %418 = vmatpush1.msra.mxu0 %v394
    %419 = vmatprep.subr.mxu0 %v402
    %420 = vmatpush1.msra.mxu0 %v400
    %421 = vmatprep.subr.mxu0 0.0
    %422 = vmatpush1.msra.mxu0 0.0
    %423 = vmatprep.subr.mxu0 0.0
    %424 = vmatpush1.msra.mxu0 0.0
    %425 = vmatprep.subr.mxu0 0.0
    %426 = vmatpush1.msra.mxu0 0.0
    %427 = vmatprep.subr.mxu0 0.0
    %428 = vmatpush1.msra.mxu0 0.0
    %429 = vmatprep.subr.mxu0 0.0
    %430 = vmatpush1.msra.mxu0 0.0
    %431 = vmatprep.subr.mxu0 0.0
    %432 = vmatpush1.msra.mxu0 0.0
    %433 = vmatprep.subr.mxu0 0.0
    %434 = vmatpush1.msra.mxu0 0.0
    %435 = vmatprep.subr.mxu0 0.0
    %436 = vmatpush1.msra.mxu0 0.0
    %437 = vmatprep.subr.mxu0 0.0
    %438 = vmatpush1.msra.mxu0 0.0
    %439 = vmatprep.subr.mxu0 0.0
    %440 = vmatpush1.msra.mxu0 0.0
    %441 = vmatprep.subr.mxu0 0.0
    %442 = vmatpush1.msra.mxu0 0.0
    %443 = vmatprep.subr.mxu0 0.0
    %444 = vmatpush1.msra.mxu0 0.0
    %445 = vmatprep.subr.mxu0 0.0
    %446 = vmatpush1.msra.mxu0 0.0
    %447 = vmatprep.subr.mxu0 0.0
    %448 = vmatpush1.msra.mxu0 0.0
    %449 = vmatprep.subr.mxu0 0.0
    %450 = vmatpush1.msra.mxu0 0.0
    %451 = vmatprep.subr.mxu0 0.0
    %452 = vmatpush1.msra.mxu0 0.0
    %453 = vmatprep.subr.mxu0 0.0
    %454 = vmatpush1.msra.mxu0 0.0
    %455 = vmatprep.subr.mxu0 0.0
    %456 = vmatpush1.msra.mxu0 0.0
    %457 = vmatprep.subr.mxu0 0.0
    %458 = vmatpush1.msra.mxu0 0.0
    %459 = vmatprep.subr.mxu0 0.0
    %460 = vmatpush1.msra.mxu0 0.0
    %461 = vmatprep.subr.mxu0 0.0
    %462 = vmatpush1.msra.mxu0 0.0
    %463 = vmatprep.subr.mxu0 0.0
    %464 = vmatpush1.msra.mxu0 0.0
    %465 = vmatprep.subr.mxu0 0.0
    %466 = vmatpush1.msra.mxu0 0.0
    %467 = vmatprep.subr.mxu0 0.0
    %468 = vmatpush1.msra.mxu0 0.0
    %469 = vmatprep.subr.mxu0 0.0
    %470 = vmatpush1.msra.mxu0 0.0
    %471 = vmatprep.subr.mxu0 0.0
    %472 = vmatpush1.msra.mxu0 0.0
    %473 = vmatprep.subr.mxu0 0.0
    %474 = vmatpush1.msra.mxu0 0.0
    %475 = vmatprep.subr.mxu0 0.0
    %476 = vmatpush1.msra.mxu0 0.0
    %477 = vmatprep.mubr.f32.mxu0 0.0
    %478 = vmatmul.mubr.f32.gmra.mrb[0].mxu0 %v408
    %v479 = vpop.f32.mrb[0].mxu0
    %v480 = vadd.f32 0.0, %v479
    %v481 = vpop.f32.mrb[0].mxu0
    %v482 = vadd.f32 0.0, %v481
    %483 = vmatprep.mubr.f32.mxu0 0.0
    %484 = vmatmul.mubr.f32.gmra.mrb[0].mxu0 %v411
    %v485 = vpop.f32.mrb[0].mxu0
    %v486 = vadd.f32 0.0, %v485
    %v487 = vpop.f32.mrb[0].mxu0
    %v488 = vadd.f32 0.0, %v487
    %489 = vdwg.mxu0
    %v490 = vadd.f32 %v317, %v480
    %v491 = vadd.f32 %v319, %v482
    %v492 = vadd.f32 %v323, %v486
    %v493 = vadd.f32 %v325, %v488
    %v494 = vld [vmem:[%s7] sm:$0x3]
    %v496 = vlaneseq
    %v497 = vshrl.u32 %v496, 7
    %v498 = vsub.s32 0, %v497
    %v499 = vrot.slane %v494, %v498
    %v500 = vlaneseq
    %v501 = vshrl.u32 %v500, 7
    %v502 = vsub.s32 1, %v501
    %v503 = vrot.slane %v494, %v502
    %v506 = vadd.f32 %v490, %v499
    %v507 = vadd.f32 %v491, %v503
    %v508 = vadd.f32 %v492, %v499
    %v509 = vadd.f32 %v493, %v503
    %v510 = vmax.f32 %v506, 0.0
    %v511 = vmax.f32 %v507, 0.0
    %v512 = vmax.f32 %v508, 0.0
    %v513 = vmax.f32 %v509, 0.0
    %v514 = vld [vmem:[#allocation4] sm:$0xff]
    %v515 = vld [vmem:[#allocation4 + $0x8] sm:$0xff]
    %v516 = vld [vmem:[#allocation4 + $0x10] sm:$0xff]
    %v517 = vld [vmem:[#allocation4 + $0x18] sm:$0xff]
    %v518 = vld [vmem:[#allocation4 + $0x20] sm:$0xff]
    %v519 = vld [vmem:[#allocation4 + $0x28] sm:$0xff]
    %v520 = vld [vmem:[#allocation4 + $0x30] sm:$0xff]
    %v521 = vld [vmem:[#allocation4 + $0x38] sm:$0xff]
    %v522 = vld [vmem:[#allocation4 + $0x40] sm:$0xff]
    %v523 = vld [vmem:[#allocation4 + $0x48] sm:$0xff]
    %v524 = vld [vmem:[#allocation4 + $0x50] sm:$0xff]
    %v525 = vld [vmem:[#allocation4 + $0x58] sm:$0xff]
    %v526 = vld [vmem:[#allocation4 + $0x60] sm:$0xff]
    %v527 = vld [vmem:[#allocation4 + $0x68] sm:$0xff]
    %v528 = vld [vmem:[#allocation4 + $0x70] sm:$0xff]
    %v529 = vld [vmem:[#allocation4 + $0x78] sm:$0xff]
    %v530 = vld [vmem:[#allocation4 + $0x80] sm:$0xff]
    %v531 = vld [vmem:[#allocation4 + $0x88] sm:$0xff]
    %v532 = vld [vmem:[#allocation4 + $0x90] sm:$0xff]
    %v533 = vld [vmem:[#allocation4 + $0x98] sm:$0xff]
    %v534 = vld [vmem:[#allocation4 + $0xa0] sm:$0xff]
    %v535 = vld [vmem:[#allocation4 + $0xa8] sm:$0xff]
    %v536 = vld [vmem:[#allocation4 + $0xb0] sm:$0xff]
    %v537 = vld [vmem:[#allocation4 + $0xb8] sm:$0xff]
    %v538 = vld [vmem:[#allocation4 + $0xc0] sm:$0xff]
    %v539 = vld [vmem:[#allocation4 + $0xc8] sm:$0xff]
    %v540 = vld [vmem:[#allocation4 + $0xd0] sm:$0xff]
    %v541 = vld [vmem:[#allocation4 + $0xd8] sm:$0xff]
    %v542 = vld [vmem:[#allocation4 + $0xe0] sm:$0xff]
    %v543 = vld [vmem:[#allocation4 + $0xe8] sm:$0xff]
    %v544 = vld [vmem:[#allocation4 + $0xf0] sm:$0xff]
    %v545 = vld [vmem:[#allocation4 + $0xf8] sm:$0xff]
    %v546 = vld [vmem:[#allocation4 + $0x100] sm:$0xff]
    %v547 = vld [vmem:[#allocation4 + $0x108] sm:$0xff]
    %v548 = vld [vmem:[#allocation4 + $0x110] sm:$0xff]
    %v549 = vld [vmem:[#allocation4 + $0x118] sm:$0xff]
    %v550 = vld [vmem:[#allocation4 + $0x120] sm:$0xff]
    %v551 = vld [vmem:[#allocation4 + $0x128] sm:$0xff]
    %v552 = vld [vmem:[#allocation4 + $0x130] sm:$0xff]
    %v553 = vld [vmem:[#allocation4 + $0x138] sm:$0xff]
    %v554 = vld [vmem:[#allocation4 + $0x140] sm:$0xff]
    %v555 = vld [vmem:[#allocation4 + $0x148] sm:$0xff]
    %v556 = vld [vmem:[#allocation4 + $0x150] sm:$0xff]
    %v557 = vld [vmem:[#allocation4 + $0x158] sm:$0xff]
    %v558 = vld [vmem:[#allocation4 + $0x160] sm:$0xff]
    %v559 = vld [vmem:[#allocation4 + $0x168] sm:$0xff]
    %v560 = vld [vmem:[#allocation4 + $0x170] sm:$0xff]
    %v561 = vld [vmem:[#allocation4 + $0x178] sm:$0xff]
    %v562 = vld [vmem:[#allocation4 + $0x180] sm:$0xff]
    %v563 = vld [vmem:[#allocation4 + $0x188] sm:$0xff]
    %v564 = vld [vmem:[#allocation4 + $0x190] sm:$0xff]
    %v565 = vld [vmem:[#allocation4 + $0x198] sm:$0xff]
    %v566 = vld [vmem:[#allocation4 + $0x1a0] sm:$0xff]
    %v567 = vld [vmem:[#allocation4 + $0x1a8] sm:$0xff]
    %v568 = vld [vmem:[#allocation4 + $0x1b0] sm:$0xff]
    %v569 = vld [vmem:[#allocation4 + $0x1b8] sm:$0xff]
    %v570 = vld [vmem:[#allocation4 + $0x1c0] sm:$0xff]
    %v571 = vld [vmem:[#allocation4 + $0x1c8] sm:$0xff]
    %v572 = vld [vmem:[#allocation4 + $0x1d0] sm:$0xff]
    %v573 = vld [vmem:[#allocation4 + $0x1d8] sm:$0xff]
    %v574 = vld [vmem:[#allocation4 + $0x1e0] sm:$0xff]
    %v575 = vld [vmem:[#allocation4 + $0x1e8] sm:$0xff]
    %v576 = vld [vmem:[#allocation4 + $0x1f0] sm:$0xff]
    %v577 = vld [vmem:[#allocation4 + $0x1f8] sm:$0xff]
    %v578 = vld [vmem:[#allocation4 + $0x200] sm:$0xff]
    %v579 = vld [vmem:[#allocation4 + $0x208] sm:$0xff]
    %v580 = vld [vmem:[#allocation4 + $0x210] sm:$0xff]
    %v581 = vld [vmem:[#allocation4 + $0x218] sm:$0xff]
    %v582 = vld [vmem:[#allocation4 + $0x220] sm:$0xff]
    %v583 = vld [vmem:[#allocation4 + $0x228] sm:$0xff]
    %v584 = vld [vmem:[#allocation4 + $0x230] sm:$0xff]
    %v585 = vld [vmem:[#allocation4 + $0x238] sm:$0xff]
    %v586 = vld [vmem:[#allocation4 + $0x240] sm:$0xff]
    %v587 = vld [vmem:[#allocation4 + $0x248] sm:$0xff]
    %v588 = vld [vmem:[#allocation4 + $0x250] sm:$0xff]
    %v589 = vld [vmem:[#allocation4 + $0x258] sm:$0xff]
    %v590 = vld [vmem:[#allocation4 + $0x260] sm:$0xff]
    %v591 = vld [vmem:[#allocation4 + $0x268] sm:$0xff]
    %v592 = vld [vmem:[#allocation4 + $0x270] sm:$0xff]
    %v593 = vld [vmem:[#allocation4 + $0x278] sm:$0xff]
    %v594 = vld [vmem:[#allocation4 + $0x280] sm:$0xff]
    %v595 = vld [vmem:[#allocation4 + $0x288] sm:$0xff]
    %v596 = vld [vmem:[#allocation4 + $0x290] sm:$0xff]
    %v597 = vld [vmem:[#allocation4 + $0x298] sm:$0xff]
    %v598 = vld [vmem:[#allocation4 + $0x2a0] sm:$0xff]
    %v599 = vld [vmem:[#allocation4 + $0x2a8] sm:$0xff]
    %v600 = vld [vmem:[#allocation4 + $0x2b0] sm:$0xff]
    %v601 = vld [vmem:[#allocation4 + $0x2b8] sm:$0xff]
    %v602 = vld [vmem:[#allocation4 + $0x2c0] sm:$0xff]
    %v603 = vld [vmem:[#allocation4 + $0x2c8] sm:$0xff]
    %v604 = vld [vmem:[#allocation4 + $0x2d0] sm:$0xff]
    %v605 = vld [vmem:[#allocation4 + $0x2d8] sm:$0xff]
    %v606 = vld [vmem:[#allocation4 + $0x2e0] sm:$0xff]
    %v607 = vld [vmem:[#allocation4 + $0x2e8] sm:$0xff]
    %v608 = vld [vmem:[#allocation4 + $0x2f0] sm:$0xff]
    %v609 = vld [vmem:[#allocation4 + $0x2f8] sm:$0xff]
    %v610 = vld [vmem:[#allocation4 + $0x300] sm:$0xff]
    %v611 = vld [vmem:[#allocation4 + $0x308] sm:$0xff]
    %v612 = vld [vmem:[#allocation4 + $0x310] sm:$0xff]
    %v613 = vld [vmem:[#allocation4 + $0x318] sm:$0xff]
    %v614 = vld [vmem:[#allocation4 + $0x320] sm:$0xff]
    %v615 = vld [vmem:[#allocation4 + $0x328] sm:$0xff]
    %v616 = vld [vmem:[#allocation4 + $0x330] sm:$0xff]
    %v617 = vld [vmem:[#allocation4 + $0x338] sm:$0xff]
    %v618 = vld [vmem:[#allocation4 + $0x340] sm:$0xff]
    %v619 = vld [vmem:[#allocation4 + $0x348] sm:$0xff]
    %v620 = vld [vmem:[#allocation4 + $0x350] sm:$0xff]
    %v621 = vld [vmem:[#allocation4 + $0x358] sm:$0xff]
    %v622 = vld [vmem:[#allocation4 + $0x360] sm:$0xff]
    %v623 = vld [vmem:[#allocation4 + $0x368] sm:$0xff]
    %v624 = vld [vmem:[#allocation4 + $0x370] sm:$0xff]
    %v625 = vld [vmem:[#allocation4 + $0x378] sm:$0xff]
    %v626 = vld [vmem:[#allocation4 + $0x380] sm:$0xff]
    %v627 = vld [vmem:[#allocation4 + $0x388] sm:$0xff]
    %v628 = vld [vmem:[#allocation4 + $0x390] sm:$0xff]
    %v629 = vld [vmem:[#allocation4 + $0x398] sm:$0xff]
    %v630 = vld [vmem:[#allocation4 + $0x3a0] sm:$0xff]
    %v631 = vld [vmem:[#allocation4 + $0x3a8] sm:$0xff]
    %v632 = vld [vmem:[#allocation4 + $0x3b0] sm:$0xff]
    %v633 = vld [vmem:[#allocation4 + $0x3b8] sm:$0xff]
    %v634 = vld [vmem:[#allocation4 + $0x3c0] sm:$0xff]
    %v635 = vld [vmem:[#allocation4 + $0x3c8] sm:$0xff]
    %v636 = vld [vmem:[#allocation4 + $0x3d0] sm:$0xff]
    %v637 = vld [vmem:[#allocation4 + $0x3d8] sm:$0xff]
    %v638 = vld [vmem:[#allocation4 + $0x3e0] sm:$0xff]
    %v639 = vld [vmem:[#allocation4 + $0x3e8] sm:$0xff]
    %v640 = vld [vmem:[#allocation4 + $0x3f0] sm:$0xff]
    %v641 = vld [vmem:[#allocation4 + $0x3f8] sm:$0xff]
    %v642 = vld [vmem:[#allocation4 + $0x400] sm:$0xff]
    %v643 = vld [vmem:[#allocation4 + $0x408] sm:$0xff]
    %v644 = vld [vmem:[#allocation4 + $0x410] sm:$0xff]
    %v645 = vld [vmem:[#allocation4 + $0x418] sm:$0xff]
    %v646 = vld [vmem:[#allocation4 + $0x420] sm:$0xff]
    %v647 = vld [vmem:[#allocation4 + $0x428] sm:$0xff]
    %v648 = vld [vmem:[#allocation4 + $0x430] sm:$0xff]
    %v649 = vld [vmem:[#allocation4 + $0x438] sm:$0xff]
    %v650 = vld [vmem:[#allocation4 + $0x440] sm:$0xff]
    %v651 = vld [vmem:[#allocation4 + $0x448] sm:$0xff]
    %v652 = vld [vmem:[#allocation4 + $0x450] sm:$0xff]
    %v653 = vld [vmem:[#allocation4 + $0x458] sm:$0xff]
    %v654 = vld [vmem:[#allocation4 + $0x460] sm:$0xff]
    %v655 = vld [vmem:[#allocation4 + $0x468] sm:$0xff]
    %v656 = vld [vmem:[#allocation4 + $0x470] sm:$0xff]
    %v657 = vld [vmem:[#allocation4 + $0x478] sm:$0xff]
    %v658 = vld [vmem:[#allocation4 + $0x480] sm:$0xff]
    %v659 = vld [vmem:[#allocation4 + $0x488] sm:$0xff]
    %v660 = vld [vmem:[#allocation4 + $0x490] sm:$0xff]
    %v661 = vld [vmem:[#allocation4 + $0x498] sm:$0xff]
    %v662 = vld [vmem:[#allocation4 + $0x4a0] sm:$0xff]
    %v663 = vld [vmem:[#allocation4 + $0x4a8] sm:$0xff]
    %v664 = vld [vmem:[#allocation4 + $0x4b0] sm:$0xff]
    %v665 = vld [vmem:[#allocation4 + $0x4b8] sm:$0xff]
    %v666 = vld [vmem:[#allocation4 + $0x4c0] sm:$0xff]
    %v667 = vld [vmem:[#allocation4 + $0x4c8] sm:$0xff]
    %v668 = vld [vmem:[#allocation4 + $0x4d0] sm:$0xff]
    %v669 = vld [vmem:[#allocation4 + $0x4d8] sm:$0xff]
    %v670 = vld [vmem:[#allocation4 + $0x4e0] sm:$0xff]
    %v671 = vld [vmem:[#allocation4 + $0x4e8] sm:$0xff]
    %v672 = vld [vmem:[#allocation4 + $0x4f0] sm:$0xff]
    %v673 = vld [vmem:[#allocation4 + $0x4f8] sm:$0xff]
    %v674 = vld [vmem:[#allocation4 + $0x500] sm:$0xff]
    %v675 = vld [vmem:[#allocation4 + $0x508] sm:$0xff]
    %v676 = vld [vmem:[#allocation4 + $0x510] sm:$0xff]
    %v677 = vld [vmem:[#allocation4 + $0x518] sm:$0xff]
    %v678 = vld [vmem:[#allocation4 + $0x520] sm:$0xff]
    %v679 = vld [vmem:[#allocation4 + $0x528] sm:$0xff]
    %v680 = vld [vmem:[#allocation4 + $0x530] sm:$0xff]
    %v681 = vld [vmem:[#allocation4 + $0x538] sm:$0xff]
    %v682 = vld [vmem:[#allocation4 + $0x540] sm:$0xff]
    %v683 = vld [vmem:[#allocation4 + $0x548] sm:$0xff]
    %v684 = vld [vmem:[#allocation4 + $0x550] sm:$0xff]
    %v685 = vld [vmem:[#allocation4 + $0x558] sm:$0xff]
    %v686 = vld [vmem:[#allocation4 + $0x560] sm:$0xff]
    %v687 = vld [vmem:[#allocation4 + $0x568] sm:$0xff]
    %v688 = vld [vmem:[#allocation4 + $0x570] sm:$0xff]
    %v689 = vld [vmem:[#allocation4 + $0x578] sm:$0xff]
    %v690 = vld [vmem:[#allocation4 + $0x580] sm:$0xff]
    %v691 = vld [vmem:[#allocation4 + $0x588] sm:$0xff]
    %v692 = vld [vmem:[#allocation4 + $0x590] sm:$0xff]
    %v693 = vld [vmem:[#allocation4 + $0x598] sm:$0xff]
    %v694 = vld [vmem:[#allocation4 + $0x5a0] sm:$0xff]
    %v695 = vld [vmem:[#allocation4 + $0x5a8] sm:$0xff]
    %v696 = vld [vmem:[#allocation4 + $0x5b0] sm:$0xff]
    %v697 = vld [vmem:[#allocation4 + $0x5b8] sm:$0xff]
    %v698 = vld [vmem:[#allocation4 + $0x5c0] sm:$0xff]
    %v699 = vld [vmem:[#allocation4 + $0x5c8] sm:$0xff]
    %v700 = vld [vmem:[#allocation4 + $0x5d0] sm:$0xff]
    %v701 = vld [vmem:[#allocation4 + $0x5d8] sm:$0xff]
    %v702 = vld [vmem:[#allocation4 + $0x5e0] sm:$0xff]
    %v703 = vld [vmem:[#allocation4 + $0x5e8] sm:$0xff]
    %v704 = vld [vmem:[#allocation4 + $0x5f0] sm:$0xff]
    %v705 = vld [vmem:[#allocation4 + $0x5f8] sm:$0xff]
    %706 = vmatprep.subr.mxu0 %v515
    %707 = vmatpush1.msra.mxu0 %v514
    %708 = vmatprep.subr.mxu0 %v521
    %709 = vmatpush1.msra.mxu0 %v520
    %710 = vmatprep.subr.mxu0 %v527
    %711 = vmatpush1.msra.mxu0 %v526
    %712 = vmatprep.subr.mxu0 %v533
    %713 = vmatpush1.msra.mxu0 %v532
    %714 = vmatprep.subr.mxu0 %v539
    %715 = vmatpush1.msra.mxu0 %v538
    %716 = vmatprep.subr.mxu0 %v545
    %717 = vmatpush1.msra.mxu0 %v544
    %718 = vmatprep.subr.mxu0 %v551
    %719 = vmatpush1.msra.mxu0 %v550
    %720 = vmatprep.subr.mxu0 %v557
    %721 = vmatpush1.msra.mxu0 %v556
    %722 = vmatprep.subr.mxu0 %v563
    %723 = vmatpush1.msra.mxu0 %v562
    %724 = vmatprep.subr.mxu0 %v569
    %725 = vmatpush1.msra.mxu0 %v568
    %726 = vmatprep.subr.mxu0 %v575
    %727 = vmatpush1.msra.mxu0 %v574
    %728 = vmatprep.subr.mxu0 %v581
    %729 = vmatpush1.msra.mxu0 %v580
    %730 = vmatprep.subr.mxu0 %v587
    %731 = vmatpush1.msra.mxu0 %v586
    %732 = vmatprep.subr.mxu0 %v593
    %733 = vmatpush1.msra.mxu0 %v592
    %734 = vmatprep.subr.mxu0 %v599
    %735 = vmatpush1.msra.mxu0 %v598
    %736 = vmatprep.subr.mxu0 %v605
    %737 = vmatpush1.msra.mxu0 %v604
    %738 = vmatprep.subr.mxu0 %v611
    %739 = vmatpush1.msra.mxu0 %v610
    %740 = vmatprep.subr.mxu0 %v617
    %741 = vmatpush1.msra.mxu0 %v616
    %742 = vmatprep.subr.mxu0 %v623
    %743 = vmatpush1.msra.mxu0 %v622
    %744 = vmatprep.subr.mxu0 %v629
    %745 = vmatpush1.msra.mxu0 %v628
    %746 = vmatprep.subr.mxu0 %v635
    %747 = vmatpush1.msra.mxu0 %v634
    %748 = vmatprep.subr.mxu0 %v641
    %749 = vmatpush1.msra.mxu0 %v640
    %750 = vmatprep.subr.mxu0 %v647
    %751 = vmatpush1.msra.mxu0 %v646
    %752 = vmatprep.subr.mxu0 %v653
    %753 = vmatpush1.msra.mxu0 %v652
    %754 = vmatprep.subr.mxu0 %v659
    %755 = vmatpush1.msra.mxu0 %v658
    %756 = vmatprep.subr.mxu0 %v665
    %757 = vmatpush1.msra.mxu0 %v664
    %758 = vmatprep.subr.mxu0 %v671
    %759 = vmatpush1.msra.mxu0 %v670
    %760 = vmatprep.subr.mxu0 %v677
    %761 = vmatpush1.msra.mxu0 %v676
    %762 = vmatprep.subr.mxu0 %v683
    %763 = vmatpush1.msra.mxu0 %v682
    %764 = vmatprep.subr.mxu0 %v689
    %765 = vmatpush1.msra.mxu0 %v688
    %766 = vmatprep.subr.mxu0 %v695
    %767 = vmatpush1.msra.mxu0 %v694
    %768 = vmatprep.subr.mxu0 %v701
    %769 = vmatpush1.msra.mxu0 %v700
    %770 = vmatprep.mubr.f32.mxu0 %v511
    %771 = vmatmul.mubr.f32.gmra.mrb[0].mxu0 %v510
    %v772 = vpop.f32.mrb[0].mxu0
    %v773 = vadd.f32 0.0, %v772
    %v774 = vpop.f32.mrb[0].mxu0
    %v775 = vadd.f32 0.0, %v774
    %776 = vmatprep.mubr.f32.mxu0 %v513
    %777 = vmatmul.mubr.f32.gmra.mrb[0].mxu0 %v512
    %v778 = vpop.f32.mrb[0].mxu0
    %v779 = vadd.f32 0.0, %v778
    %v780 = vpop.f32.mrb[0].mxu0
    %v781 = vadd.f32 0.0, %v780
    %782 = vdwg.mxu0
    %783 = vmatprep.subr.mxu0 %v517
    %784 = vmatpush1.msra.mxu0 %v516
    %785 = vmatprep.subr.mxu0 %v523
    %786 = vmatpush1.msra.mxu0 %v522
    %787 = vmatprep.subr.mxu0 %v529
    %788 = vmatpush1.msra.mxu0 %v528
    %789 = vmatprep.subr.mxu0 %v535
    %790 = vmatpush1.msra.mxu0 %v534
    %791 = vmatprep.subr.mxu0 %v541
    %792 = vmatpush1.msra.mxu0 %v540
    %793 = vmatprep.subr.mxu0 %v547
    %794 = vmatpush1.msra.mxu0 %v546
    %795 = vmatprep.subr.mxu0 %v553
    %796 = vmatpush1.msra.mxu0 %v552
    %797 = vmatprep.subr.mxu0 %v559
    %798 = vmatpush1.msra.mxu0 %v558
    %799 = vmatprep.subr.mxu0 %v565
    %800 = vmatpush1.msra.mxu0 %v564
    %801 = vmatprep.subr.mxu0 %v571
    %802 = vmatpush1.msra.mxu0 %v570
    %803 = vmatprep.subr.mxu0 %v577
    %804 = vmatpush1.msra.mxu0 %v576
    %805 = vmatprep.subr.mxu0 %v583
    %806 = vmatpush1.msra.mxu0 %v582
    %807 = vmatprep.subr.mxu0 %v589
    %808 = vmatpush1.msra.mxu0 %v588
    %809 = vmatprep.subr.mxu0 %v595
    %810 = vmatpush1.msra.mxu0 %v594
    %811 = vmatprep.subr.mxu0 %v601
    %812 = vmatpush1.msra.mxu0 %v600
    %813 = vmatprep.subr.mxu0 %v607
    %814 = vmatpush1.msra.mxu0 %v606
    %815 = vmatprep.subr.mxu0 %v613
    %816 = vmatpush1.msra.mxu0 %v612
    %817 = vmatprep.subr.mxu0 %v619
    %818 = vmatpush1.msra.mxu0 %v618
    %819 = vmatprep.subr.mxu0 %v625
    %820 = vmatpush1.msra.mxu0 %v624
    %821 = vmatprep.subr.mxu0 %v631
    %822 = vmatpush1.msra.mxu0 %v630
    %823 = vmatprep.subr.mxu0 %v637
    %824 = vmatpush1.msra.mxu0 %v636
    %825 = vmatprep.subr.mxu0 %v643
    %826 = vmatpush1.msra.mxu0 %v642
    %827 = vmatprep.subr.mxu0 %v649
    %828 = vmatpush1.msra.mxu0 %v648
    %829 = vmatprep.subr.mxu0 %v655
    %830 = vmatpush1.msra.mxu0 %v654
    %831 = vmatprep.subr.mxu0 %v661
    %832 = vmatpush1.msra.mxu0 %v660
    %833 = vmatprep.subr.mxu0 %v667
    %834 = vmatpush1.msra.mxu0 %v666
    %835 = vmatprep.subr.mxu0 %v673
    %836 = vmatpush1.msra.mxu0 %v672
    %837 = vmatprep.subr.mxu0 %v679
    %838 = vmatpush1.msra.mxu0 %v678
    %839 = vmatprep.subr.mxu0 %v685
    %840 = vmatpush1.msra.mxu0 %v684
    %841 = vmatprep.subr.mxu0 %v691
    %842 = vmatpush1.msra.mxu0 %v690
    %843 = vmatprep.subr.mxu0 %v697
    %844 = vmatpush1.msra.mxu0 %v696
    %845 = vmatprep.subr.mxu0 %v703
    %846 = vmatpush1.msra.mxu0 %v702
    %847 = vmatprep.mubr.f32.mxu0 %v511
    %848 = vmatmul.mubr.f32.gmra.mrb[0].mxu0 %v510
    %v849 = vpop.f32.mrb[0].mxu0
    %v850 = vadd.f32 0.0, %v849
    %v851 = vpop.f32.mrb[0].mxu0
    %v852 = vadd.f32 0.0, %v851
    %853 = vmatprep.mubr.f32.mxu0 %v513
    %854 = vmatmul.mubr.f32.gmra.mrb[0].mxu0 %v512
    %v855 = vpop.f32.mrb[0].mxu0
    %v856 = vadd.f32 0.0, %v855
    %v857 = vpop.f32.mrb[0].mxu0
    %v858 = vadd.f32 0.0, %v857
    %859 = vdwg.mxu0
    %860 = vmatprep.subr.mxu0 %v519
    %861 = vmatpush1.msra.mxu0 %v518
    %862 = vmatprep.subr.mxu0 %v525
    %863 = vmatpush1.msra.mxu0 %v524
    %864 = vmatprep.subr.mxu0 %v531
    %865 = vmatpush1.msra.mxu0 %v530
    %866 = vmatprep.subr.mxu0 %v537
    %867 = vmatpush1.msra.mxu0 %v536
    %868 = vmatprep.subr.mxu0 %v543
    %869 = vmatpush1.msra.mxu0 %v542
    %870 = vmatprep.subr.mxu0 %v549
    %871 = vmatpush1.msra.mxu0 %v548
    %872 = vmatprep.subr.mxu0 %v555
    %873 = vmatpush1.msra.mxu0 %v554
    %874 = vmatprep.subr.mxu0 %v561
    %875 = vmatpush1.msra.mxu0 %v560
    %876 = vmatprep.subr.mxu0 %v567
    %877 = vmatpush1.msra.mxu0 %v566
    %878 = vmatprep.subr.mxu0 %v573
    %879 = vmatpush1.msra.mxu0 %v572
    %880 = vmatprep.subr.mxu0 %v579
    %881 = vmatpush1.msra.mxu0 %v578
    %882 = vmatprep.subr.mxu0 %v585
    %883 = vmatpush1.msra.mxu0 %v584
    %884 = vmatprep.subr.mxu0 %v591
    %885 = vmatpush1.msra.mxu0 %v590
    %886 = vmatprep.subr.mxu0 %v597
    %887 = vmatpush1.msra.mxu0 %v596
    %888 = vmatprep.subr.mxu0 %v603
    %889 = vmatpush1.msra.mxu0 %v602
    %890 = vmatprep.subr.mxu0 %v609
    %891 = vmatpush1.msra.mxu0 %v608
    %892 = vmatprep.subr.mxu0 %v615
    %893 = vmatpush1.msra.mxu0 %v614
    %894 = vmatprep.subr.mxu0 %v621
    %895 = vmatpush1.msra.mxu0 %v620
    %896 = vmatprep.subr.mxu0 %v627
    %897 = vmatpush1.msra.mxu0 %v626
    %898 = vmatprep.subr.mxu0 %v633
    %899 = vmatpush1.msra.mxu0 %v632
    %900 = vmatprep.subr.mxu0 %v639
    %901 = vmatpush1.msra.mxu0 %v638
    %902 = vmatprep.subr.mxu0 %v645
    %903 = vmatpush1.msra.mxu0 %v644
    %904 = vmatprep.subr.mxu0 %v651
    %905 = vmatpush1.msra.mxu0 %v650
    %906 = vmatprep.subr.mxu0 %v657
    %907 = vmatpush1.msra.mxu0 %v656
    %908 = vmatprep.subr.mxu0 %v663
    %909 = vmatpush1.msra.mxu0 %v662
    %910 = vmatprep.subr.mxu0 %v669
    %911 = vmatpush1.msra.mxu0 %v668
    %912 = vmatprep.subr.mxu0 %v675
    %913 = vmatpush1.msra.mxu0 %v674
    %914 = vmatprep.subr.mxu0 %v681
    %915 = vmatpush1.msra.mxu0 %v680
    %916 = vmatprep.subr.mxu0 %v687
    %917 = vmatpush1.msra.mxu0 %v686
    %918 = vmatprep.subr.mxu0 %v693
    %919 = vmatpush1.msra.mxu0 %v692
    %920 = vmatprep.subr.mxu0 %v699
    %921 = vmatpush1.msra.mxu0 %v698
    %922 = vmatprep.subr.mxu0 %v705
    %923 = vmatpush1.msra.mxu0 %v704
    %924 = vmatprep.mubr.f32.mxu0 %v511
    %925 = vmatmul.mubr.f32.gmra.mrb[0].mxu0 %v510
    %v926 = vpop.f32.mrb[0].mxu0
    %v927 = vadd.f32 0.0, %v926
    %v928 = vpop.f32.mrb[0].mxu0
    %v929 = vadd.f32 0.0, %v928
    %930 = vmatprep.mubr.f32.mxu0 %v513
    %931 = vmatmul.mubr.f32.gmra.mrb[0].mxu0 %v512
    %v932 = vpop.f32.mrb[0].mxu0
    %v933 = vadd.f32 0.0, %v932
    %v934 = vpop.f32.mrb[0].mxu0
    %v935 = vadd.f32 0.0, %v934
    %936 = vdwg.mxu0
    %937 = vmatprep.subr.mxu0 %v775
    %938 = vmatpush1.msra.mxu0 %v773
    %939 = vmatprep.subr.mxu0 %v781
    %940 = vmatpush1.msra.mxu0 %v779
    %941 = vmatprep.subr.mxu0 %v929
    %942 = vmatpush1.msra.mxu0 %v927
    %943 = vmatprep.subr.mxu0 %v935
    %944 = vmatpush1.msra.mxu0 %v933
    %945 = vmatprep.subr.mxu0 0.0
    %946 = vmatpush1.msra.mxu0 0.0
    %947 = vmatprep.subr.mxu0 0.0
    %948 = vmatpush1.msra.mxu0 0.0
    %949 = vmatprep.subr.mxu0 0.0
    %950 = vmatpush1.msra.mxu0 0.0
    %951 = vmatprep.subr.mxu0 0.0
    %952 = vmatpush1.msra.mxu0 0.0
    %953 = vmatprep.subr.mxu0 0.0
    %954 = vmatpush1.msra.mxu0 0.0
    %955 = vmatprep.subr.mxu0 0.0
    %956 = vmatpush1.msra.mxu0 0.0
    %957 = vmatprep.subr.mxu0 0.0
    %958 = vmatpush1.msra.mxu0 0.0
    %959 = vmatprep.subr.mxu0 0.0
    %960 = vmatpush1.msra.mxu0 0.0
    %961 = vmatprep.subr.mxu0 0.0
    %962 = vmatpush1.msra.mxu0 0.0
    %963 = vmatprep.subr.mxu0 0.0
    %964 = vmatpush1.msra.mxu0 0.0
    %965 = vmatprep.subr.mxu0 0.0
    %966 = vmatpush1.msra.mxu0 0.0
    %967 = vmatprep.subr.mxu0 0.0
    %968 = vmatpush1.msra.mxu0 0.0
    %969 = vmatprep.subr.mxu0 0.0
    %970 = vmatpush1.msra.mxu0 0.0
    %971 = vmatprep.subr.mxu0 0.0
    %972 = vmatpush1.msra.mxu0 0.0
    %973 = vmatprep.subr.mxu0 0.0
    %974 = vmatpush1.msra.mxu0 0.0
    %975 = vmatprep.subr.mxu0 0.0
    %976 = vmatpush1.msra.mxu0 0.0
    %977 = vmatprep.subr.mxu0 0.0
    %978 = vmatpush1.msra.mxu0 0.0
    %979 = vmatprep.subr.mxu0 0.0
    %980 = vmatpush1.msra.mxu0 0.0
    %981 = vmatprep.subr.mxu0 0.0
    %982 = vmatpush1.msra.mxu0 0.0
    %983 = vmatprep.subr.mxu0 0.0
    %984 = vmatpush1.msra.mxu0 0.0
    %985 = vmatprep.subr.mxu0 0.0
    %986 = vmatpush1.msra.mxu0 0.0
    %987 = vmatprep.subr.mxu0 0.0
    %988 = vmatpush1.msra.mxu0 0.0
    %989 = vmatprep.subr.mxu0 0.0
    %990 = vmatpush1.msra.mxu0 0.0
    %991 = vmatprep.subr.mxu0 0.0
    %992 = vmatpush1.msra.mxu0 0.0
    %993 = vmatprep.subr.mxu0 0.0
    %994 = vmatpush1.msra.mxu0 0.0
    %995 = vmatprep.subr.mxu0 0.0
    %996 = vmatpush1.msra.mxu0 0.0
    %997 = vmatprep.subr.mxu0 0.0
    %998 = vmatpush1.msra.mxu0 0.0
    %999 = vmatprep.subr.mxu0 0.0
    %1000 = vmatpush1.msra.mxu0 0.0
    %1001 = vmatprep.mubr.f32.mxu0 0.0
    %1002 = vmatmul.mubr.f32.gmra.mrb[0].mxu0 %v408
    %v1003 = vpop.f32.mrb[0].mxu0
    %v1004 = vadd.f32 0.0, %v1003
    %v1005 = vpop.f32.mrb[0].mxu0
    %v1006 = vadd.f32 0.0, %v1005
    %1007 = vmatprep.mubr.f32.mxu0 0.0
    %1008 = vmatmul.mubr.f32.gmra.mrb[0].mxu0 %v411
    %v1009 = vpop.f32.mrb[0].mxu0
    %v1010 = vadd.f32 0.0, %v1009
    %v1011 = vpop.f32.mrb[0].mxu0
    %v1012 = vadd.f32 0.0, %v1011
    %1013 = vdwg.mxu0
    %v1014 = vadd.f32 %v850, %v1004
    %v1015 = vadd.f32 %v852, %v1006
    %v1016 = vadd.f32 %v856, %v1010
    %v1017 = vadd.f32 %v858, %v1012
    %v1018 = vld [vmem:[%s6] sm:$0xff]
    %v1019 = vld [vmem:[%s6 + $0x8] sm:$0xff]
    %v1020 = vld [vmem:[%s6 + $0x10] sm:$0xff]
    %vm1021 = vcmask 130048
    %v1023 = vsel %vm1021, %v1018, 0
    %v1026 = vsel %vm1021, %v1019, 0
    %v1029 = vsel %vm1021, %v1020, 0
    %1031 = vmatprep.subr.mxu0 %v1015
    %1032 = vmatpush1.msra.mxu0 %v1014
    %1033 = vmatprep.subr.mxu0 %v1017
    %1034 = vmatpush1.msra.mxu0 %v1016
    %1035 = vmatprep.subr.mxu0 0.0
    %1036 = vmatpush1.msra.mxu0 0.0
    %1037 = vmatprep.subr.mxu0 0.0
    %1038 = vmatpush1.msra.mxu0 0.0
    %1039 = vmatprep.subr.mxu0 0.0
    %1040 = vmatpush1.msra.mxu0 0.0
    %1041 = vmatprep.subr.mxu0 0.0
    %1042 = vmatpush1.msra.mxu0 0.0
    %1043 = vmatprep.subr.mxu0 0.0
    %1044 = vmatpush1.msra.mxu0 0.0
    %1045 = vmatprep.subr.mxu0 0.0
    %1046 = vmatpush1.msra.mxu0 0.0
    %1047 = vmatprep.subr.mxu0 0.0
    %1048 = vmatpush1.msra.mxu0 0.0
    %1049 = vmatprep.subr.mxu0 0.0
    %1050 = vmatpush1.msra.mxu0 0.0
    %1051 = vmatprep.subr.mxu0 0.0
    %1052 = vmatpush1.msra.mxu0 0.0
    %1053 = vmatprep.subr.mxu0 0.0
    %1054 = vmatpush1.msra.mxu0 0.0
    %1055 = vmatprep.subr.mxu0 0.0
    %1056 = vmatpush1.msra.mxu0 0.0
    %1057 = vmatprep.subr.mxu0 0.0
    %1058 = vmatpush1.msra.mxu0 0.0
    %1059 = vmatprep.subr.mxu0 0.0
    %1060 = vmatpush1.msra.mxu0 0.0
    %1061 = vmatprep.subr.mxu0 0.0
    %1062 = vmatpush1.msra.mxu0 0.0
    %1063 = vmatprep.subr.mxu0 0.0
    %1064 = vmatpush1.msra.mxu0 0.0
    %1065 = vmatprep.subr.mxu0 0.0
    %1066 = vmatpush1.msra.mxu0 0.0
    %1067 = vmatprep.subr.mxu0 0.0
    %1068 = vmatpush1.msra.mxu0 0.0
    %1069 = vmatprep.subr.mxu0 0.0
    %1070 = vmatpush1.msra.mxu0 0.0
    %1071 = vmatprep.subr.mxu0 0.0
    %1072 = vmatpush1.msra.mxu0 0.0
    %1073 = vmatprep.subr.mxu0 0.0
    %1074 = vmatpush1.msra.mxu0 0.0
    %1075 = vmatprep.subr.mxu0 0.0
    %1076 = vmatpush1.msra.mxu0 0.0
    %1077 = vmatprep.subr.mxu0 0.0
    %1078 = vmatpush1.msra.mxu0 0.0
    %1079 = vmatprep.subr.mxu0 0.0
    %1080 = vmatpush1.msra.mxu0 0.0
    %1081 = vmatprep.subr.mxu0 0.0
    %1082 = vmatpush1.msra.mxu0 0.0
    %1083 = vmatprep.subr.mxu0 0.0
    %1084 = vmatpush1.msra.mxu0 0.0
    %1085 = vmatprep.subr.mxu0 0.0
    %1086 = vmatpush1.msra.mxu0 0.0
    %1087 = vmatprep.subr.mxu0 0.0
    %1088 = vmatpush1.msra.mxu0 0.0
    %1089 = vmatprep.subr.mxu0 0.0
    %1090 = vmatpush1.msra.mxu0 0.0
    %1091 = vmatprep.subr.mxu0 0.0
    %1092 = vmatpush1.msra.mxu0 0.0
    %1093 = vmatprep.subr.mxu0 0.0
    %1094 = vmatpush1.msra.mxu0 0.0
    %1095 = vmatprep.mubr.f32.mxu0 0.0
    %1096 = vmatmul.mubr.f32.gmra.mrb[0].mxu0 %v1023
    %v1097 = vpop.f32.mrb[0].mxu0
    %v1098 = vadd.f32 0.0, %v1097
    %v1099 = vpop.f32.mrb[0].mxu0
    %v1100 = vadd.f32 0.0, %v1099
    %1101 = vmatprep.mubr.f32.mxu0 0.0
    %1102 = vmatmul.mubr.f32.gmra.mrb[0].mxu0 %v1026
    %v1103 = vpop.f32.mrb[0].mxu0
    %v1104 = vadd.f32 0.0, %v1103
    %v1105 = vpop.f32.mrb[0].mxu0
    %v1106 = vadd.f32 0.0, %v1105
    %1107 = vmatprep.mubr.f32.mxu0 0.0
    %1108 = vmatmul.mubr.f32.gmra.mrb[0].mxu0 %v1029
    %v1109 = vpop.f32.mrb[0].mxu0
    %v1110 = vadd.f32 0.0, %v1109
    %v1111 = vpop.f32.mrb[0].mxu0
    %v1112 = vadd.f32 0.0, %v1111
    %1113 = vdwg.mxu0
    %v1114 = vmax.f32 %v1098, %v1104
    %v1115 = vmax.f32 %v1100, %v1106
    %v1116 = vmax.f32 %v1114, %v1110
    %v1117 = vmax.f32 %v1115, %v1112
    %v1118 = vld [vmem:[#allocation6] sm:$0xff]
    %v1119 = vld [vmem:[#allocation6 + $0x8] sm:$0xff]
    %v1120 = vld [vmem:[#allocation6 + $0x10] sm:$0xff]
    %v1121 = vld [vmem:[#allocation6 + $0x18] sm:$0xff]
    %v1122 = vld [vmem:[#allocation6 + $0x20] sm:$0xff]
    %v1123 = vld [vmem:[#allocation6 + $0x28] sm:$0xff]
    %v1124 = vld [vmem:[#allocation6 + $0x30] sm:$0xff]
    %v1125 = vld [vmem:[#allocation6 + $0x38] sm:$0xff]
    %v1126 = vld [vmem:[#allocation6 + $0x40] sm:$0xff]
    %v1127 = vld [vmem:[#allocation6 + $0x48] sm:$0xff]
    %v1128 = vld [vmem:[#allocation6 + $0x50] sm:$0xff]
    %v1129 = vld [vmem:[#allocation6 + $0x58] sm:$0xff]
    %v1130 = vld [vmem:[#allocation6 + $0x60] sm:$0xff]
    %v1131 = vld [vmem:[#allocation6 + $0x68] sm:$0xff]
    %v1132 = vld [vmem:[#allocation6 + $0x70] sm:$0xff]
    %v1133 = vld [vmem:[#allocation6 + $0x78] sm:$0xff]
    %v1134 = vld [vmem:[#allocation6 + $0x80] sm:$0xff]
    %v1135 = vld [vmem:[#allocation6 + $0x88] sm:$0xff]
    %v1136 = vld [vmem:[#allocation6 + $0x90] sm:$0xff]
    %v1137 = vld [vmem:[#allocation6 + $0x98] sm:$0xff]
    %v1138 = vld [vmem:[#allocation6 + $0xa0] sm:$0xff]
    %v1139 = vld [vmem:[#allocation6 + $0xa8] sm:$0xff]
    %v1140 = vld [vmem:[#allocation6 + $0xb0] sm:$0xff]
    %v1141 = vld [vmem:[#allocation6 + $0xb8] sm:$0xff]
    %v1142 = vld [vmem:[#allocation6 + $0xc0] sm:$0xff]
    %v1143 = vld [vmem:[#allocation6 + $0xc8] sm:$0xff]
    %v1144 = vld [vmem:[#allocation6 + $0xd0] sm:$0xff]
    %v1145 = vld [vmem:[#allocation6 + $0xd8] sm:$0xff]
    %v1146 = vld [vmem:[#allocation6 + $0xe0] sm:$0xff]
    %v1147 = vld [vmem:[#allocation6 + $0xe8] sm:$0xff]
    %v1148 = vld [vmem:[#allocation6 + $0xf0] sm:$0xff]
    %v1149 = vld [vmem:[#allocation6 + $0xf8] sm:$0xff]
    %v1150 = vld [vmem:[#allocation6 + $0x100] sm:$0xff]
    %v1151 = vld [vmem:[#allocation6 + $0x108] sm:$0xff]
    %v1152 = vld [vmem:[#allocation6 + $0x110] sm:$0xff]
    %v1153 = vld [vmem:[#allocation6 + $0x118] sm:$0xff]
    %v1154 = vld [vmem:[#allocation6 + $0x120] sm:$0xff]
    %v1155 = vld [vmem:[#allocation6 + $0x128] sm:$0xff]
    %v1156 = vld [vmem:[#allocation6 + $0x130] sm:$0xff]
    %v1157 = vld [vmem:[#allocation6 + $0x138] sm:$0xff]
    %v1158 = vld [vmem:[#allocation6 + $0x140] sm:$0xff]
    %v1159 = vld [vmem:[#allocation6 + $0x148] sm:$0xff]
    %v1160 = vld [vmem:[#allocation6 + $0x150] sm:$0xff]
    %v1161 = vld [vmem:[#allocation6 + $0x158] sm:$0xff]
    %v1162 = vld [vmem:[#allocation6 + $0x160] sm:$0xff]
    %v1163 = vld [vmem:[#allocation6 + $0x168] sm:$0xff]
    %v1164 = vld [vmem:[#allocation6 + $0x170] sm:$0xff]
    %v1165 = vld [vmem:[#allocation6 + $0x178] sm:$0xff]
    %v1166 = vld [vmem:[#allocation6 + $0x180] sm:$0xff]
    %v1167 = vld [vmem:[#allocation6 + $0x188] sm:$0xff]
    %v1168 = vld [vmem:[#allocation6 + $0x190] sm:$0xff]
    %v1169 = vld [vmem:[#allocation6 + $0x198] sm:$0xff]
    %v1170 = vld [vmem:[#allocation6 + $0x1a0] sm:$0xff]
    %v1171 = vld [vmem:[#allocation6 + $0x1a8] sm:$0xff]
    %v1172 = vld [vmem:[#allocation6 + $0x1b0] sm:$0xff]
    %v1173 = vld [vmem:[#allocation6 + $0x1b8] sm:$0xff]
    %v1174 = vld [vmem:[#allocation6 + $0x1c0] sm:$0xff]
    %v1175 = vld [vmem:[#allocation6 + $0x1c8] sm:$0xff]
    %v1176 = vld [vmem:[#allocation6 + $0x1d0] sm:$0xff]
    %v1177 = vld [vmem:[#allocation6 + $0x1d8] sm:$0xff]
    %v1178 = vld [vmem:[#allocation6 + $0x1e0] sm:$0xff]
    %v1179 = vld [vmem:[#allocation6 + $0x1e8] sm:$0xff]
    %v1180 = vld [vmem:[#allocation6 + $0x1f0] sm:$0xff]
    %v1181 = vld [vmem:[#allocation6 + $0x1f8] sm:$0xff]
    %v1182 = vld [vmem:[#allocation6 + $0x200] sm:$0xff]
    %v1183 = vld [vmem:[#allocation6 + $0x208] sm:$0xff]
    %v1184 = vld [vmem:[#allocation6 + $0x210] sm:$0xff]
    %v1185 = vld [vmem:[#allocation6 + $0x218] sm:$0xff]
    %v1186 = vld [vmem:[#allocation6 + $0x220] sm:$0xff]
    %v1187 = vld [vmem:[#allocation6 + $0x228] sm:$0xff]
    %v1188 = vld [vmem:[#allocation6 + $0x230] sm:$0xff]
    %v1189 = vld [vmem:[#allocation6 + $0x238] sm:$0xff]
    %v1190 = vld [vmem:[#allocation6 + $0x240] sm:$0xff]
    %v1191 = vld [vmem:[#allocation6 + $0x248] sm:$0xff]
    %v1192 = vld [vmem:[#allocation6 + $0x250] sm:$0xff]
    %v1193 = vld [vmem:[#allocation6 + $0x258] sm:$0xff]
    %v1194 = vld [vmem:[#allocation6 + $0x260] sm:$0xff]
    %v1195 = vld [vmem:[#allocation6 + $0x268] sm:$0xff]
    %v1196 = vld [vmem:[#allocation6 + $0x270] sm:$0xff]
    %v1197 = vld [vmem:[#allocation6 + $0x278] sm:$0xff]
    %v1198 = vld [vmem:[#allocation6 + $0x280] sm:$0xff]
    %v1199 = vld [vmem:[#allocation6 + $0x288] sm:$0xff]
    %v1200 = vld [vmem:[#allocation6 + $0x290] sm:$0xff]
    %v1201 = vld [vmem:[#allocation6 + $0x298] sm:$0xff]
    %v1202 = vld [vmem:[#allocation6 + $0x2a0] sm:$0xff]
    %v1203 = vld [vmem:[#allocation6 + $0x2a8] sm:$0xff]
    %v1204 = vld [vmem:[#allocation6 + $0x2b0] sm:$0xff]
    %v1205 = vld [vmem:[#allocation6 + $0x2b8] sm:$0xff]
    %v1206 = vld [vmem:[#allocation6 + $0x2c0] sm:$0xff]
    %v1207 = vld [vmem:[#allocation6 + $0x2c8] sm:$0xff]
    %v1208 = vld [vmem:[#allocation6 + $0x2d0] sm:$0xff]
    %v1209 = vld [vmem:[#allocation6 + $0x2d8] sm:$0xff]
    %v1210 = vld [vmem:[#allocation6 + $0x2e0] sm:$0xff]
    %v1211 = vld [vmem:[#allocation6 + $0x2e8] sm:$0xff]
    %v1212 = vld [vmem:[#allocation6 + $0x2f0] sm:$0xff]
    %v1213 = vld [vmem:[#allocation6 + $0x2f8] sm:$0xff]
    %1214 = vmatprep.subr.mxu0 %v1119
    %1215 = vmatpush1.msra.mxu0 %v1118
    %1216 = vmatprep.subr.mxu0 %v1122
    %1217 = vmatpush1.msra.mxu0 %v1121
    %1218 = vmatprep.subr.mxu0 %v1125
    %1219 = vmatpush1.msra.mxu0 %v1124
    %1220 = vmatprep.subr.mxu0 %v1128
    %1221 = vmatpush1.msra.mxu0 %v1127
    %1222 = vmatprep.subr.mxu0 %v1131
    %1223 = vmatpush1.msra.mxu0 %v1130
    %1224 = vmatprep.subr.mxu0 %v1134
    %1225 = vmatpush1.msra.mxu0 %v1133
    %1226 = vmatprep.subr.mxu0 %v1137
    %1227 = vmatpush1.msra.mxu0 %v1136
    %1228 = vmatprep.subr.mxu0 %v1140
    %1229 = vmatpush1.msra.mxu0 %v1139
    %1230 = vmatprep.subr.mxu0 %v1143
    %1231 = vmatpush1.msra.mxu0 %v1142
    %1232 = vmatprep.subr.mxu0 %v1146
    %1233 = vmatpush1.msra.mxu0 %v1145
    %1234 = vmatprep.subr.mxu0 %v1149
    %1235 = vmatpush1.msra.mxu0 %v1148
    %1236 = vmatprep.subr.mxu0 %v1152
    %1237 = vmatpush1.msra.mxu0 %v1151
    %1238 = vmatprep.subr.mxu0 %v1155
    %1239 = vmatpush1.msra.mxu0 %v1154
    %1240 = vmatprep.subr.mxu0 %v1158
    %1241 = vmatpush1.msra.mxu0 %v1157
    %1242 = vmatprep.subr.mxu0 %v1161
    %1243 = vmatpush1.msra.mxu0 %v1160
    %1244 = vmatprep.subr.mxu0 %v1164
    %1245 = vmatpush1.msra.mxu0 %v1163
    %1246 = vmatprep.subr.mxu0 %v1167
    %1247 = vmatpush1.msra.mxu0 %v1166
    %1248 = vmatprep.subr.mxu0 %v1170
    %1249 = vmatpush1.msra.mxu0 %v1169
    %1250 = vmatprep.subr.mxu0 %v1173
    %1251 = vmatpush1.msra.mxu0 %v1172
    %1252 = vmatprep.subr.mxu0 %v1176
    %1253 = vmatpush1.msra.mxu0 %v1175
    %1254 = vmatprep.subr.mxu0 %v1179
    %1255 = vmatpush1.msra.mxu0 %v1178
    %1256 = vmatprep.subr.mxu0 %v1182
    %1257 = vmatpush1.msra.mxu0 %v1181
    %1258 = vmatprep.subr.mxu0 %v1185
    %1259 = vmatpush1.msra.mxu0 %v1184
    %1260 = vmatprep.subr.mxu0 %v1188
    %1261 = vmatpush1.msra.mxu0 %v1187
    %1262 = vmatprep.subr.mxu0 %v1191
    %1263 = vmatpush1.msra.mxu0 %v1190
    %1264 = vmatprep.subr.mxu0 %v1194
    %1265 = vmatpush1.msra.mxu0 %v1193
    %1266 = vmatprep.subr.mxu0 %v1197
    %1267 = vmatpush1.msra.mxu0 %v1196
    %1268 = vmatprep.subr.mxu0 %v1200
    %1269 = vmatpush1.msra.mxu0 %v1199
    %1270 = vmatprep.subr.mxu0 %v1203
    %1271 = vmatpush1.msra.mxu0 %v1202
    %1272 = vmatprep.subr.mxu0 %v1206
    %1273 = vmatpush1.msra.mxu0 %v1205
    %1274 = vmatprep.subr.mxu0 %v1209
    %1275 = vmatpush1.msra.mxu0 %v1208
    %1276 = vmatprep.subr.mxu0 %v1212
    %1277 = vmatpush1.msra.mxu0 %v1211
    %1278 = vmatprep.mubr.f32.mxu0 %v1117
    %1279 = vmatmul.mubr.f32.gmra.mrb[0].mxu0 %v1116
    %v1280 = vpop.f32.mrb[0].mxu0
    %v1281 = vadd.f32 0.0, %v1280
    %v1282 = vpop.f32.mrb[0].mxu0
    %v1283 = vadd.f32 0.0, %v1282
    %1284 = vdwg.mxu0
    %1285 = vmatprep.subr.mxu0 0.0
    %1286 = vmatpush1.msra.mxu0 %v1120
    %1287 = vmatprep.subr.mxu0 0.0
    %1288 = vmatpush1.msra.mxu0 %v1123
    %1289 = vmatprep.subr.mxu0 0.0
    %1290 = vmatpush1.msra.mxu0 %v1126
    %1291 = vmatprep.subr.mxu0 0.0
    %1292 = vmatpush1.msra.mxu0 %v1129
    %1293 = vmatprep.subr.mxu0 0.0
    %1294 = vmatpush1.msra.mxu0 %v1132
    %1295 = vmatprep.subr.mxu0 0.0
    %1296 = vmatpush1.msra.mxu0 %v1135
    %1297 = vmatprep.subr.mxu0 0.0
    %1298 = vmatpush1.msra.mxu0 %v1138
    %1299 = vmatprep.subr.mxu0 0.0
    %1300 = vmatpush1.msra.mxu0 %v1141
    %1301 = vmatprep.subr.mxu0 0.0
    %1302 = vmatpush1.msra.mxu0 %v1144
    %1303 = vmatprep.subr.mxu0 0.0
    %1304 = vmatpush1.msra.mxu0 %v1147
    %1305 = vmatprep.subr.mxu0 0.0
    %1306 = vmatpush1.msra.mxu0 %v1150
    %1307 = vmatprep.subr.mxu0 0.0
    %1308 = vmatpush1.msra.mxu0 %v1153
    %1309 = vmatprep.subr.mxu0 0.0
    %1310 = vmatpush1.msra.mxu0 %v1156
    %1311 = vmatprep.subr.mxu0 0.0
    %1312 = vmatpush1.msra.mxu0 %v1159
    %1313 = vmatprep.subr.mxu0 0.0
    %1314 = vmatpush1.msra.mxu0 %v1162
    %1315 = vmatprep.subr.mxu0 0.0
    %1316 = vmatpush1.msra.mxu0 %v1165
    %1317 = vmatprep.subr.mxu0 0.0
    %1318 = vmatpush1.msra.mxu0 %v1168
    %1319 = vmatprep.subr.mxu0 0.0
    %1320 = vmatpush1.msra.mxu0 %v1171
    %1321 = vmatprep.subr.mxu0 0.0
    %1322 = vmatpush1.msra.mxu0 %v1174
    %1323 = vmatprep.subr.mxu0 0.0
    %1324 = vmatpush1.msra.mxu0 %v1177
    %1325 = vmatprep.subr.mxu0 0.0
    %1326 = vmatpush1.msra.mxu0 %v1180
    %1327 = vmatprep.subr.mxu0 0.0
    %1328 = vmatpush1.msra.mxu0 %v1183
    %1329 = vmatprep.subr.mxu0 0.0
    %1330 = vmatpush1.msra.mxu0 %v1186
    %1331 = vmatprep.subr.mxu0 0.0
    %1332 = vmatpush1.msra.mxu0 %v1189
    %1333 = vmatprep.subr.mxu0 0.0
    %1334 = vmatpush1.msra.mxu0 %v1192
    %1335 = vmatprep.subr.mxu0 0.0
    %1336 = vmatpush1.msra.mxu0 %v1195
    %1337 = vmatprep.subr.mxu0 0.0
    %1338 = vmatpush1.msra.mxu0 %v1198
    %1339 = vmatprep.subr.mxu0 0.0
    %1340 = vmatpush1.msra.mxu0 %v1201
    %1341 = vmatprep.subr.mxu0 0.0
    %1342 = vmatpush1.msra.mxu0 %v1204
    %1343 = vmatprep.subr.mxu0 0.0
    %1344 = vmatpush1.msra.mxu0 %v1207
    %1345 = vmatprep.subr.mxu0 0.0
    %1346 = vmatpush1.msra.mxu0 %v1210
    %1347 = vmatprep.subr.mxu0 0.0
    %1348 = vmatpush1.msra.mxu0 %v1213
    %1349 = vmatprep.mubr.f32.mxu0 %v1117
    %1350 = vmatmul.mubr.f32.gmra.mrb[0].mxu0 %v1116
    %v1351 = vpop.f32.mrb[0].mxu0
    %v1352 = vadd.f32 0.0, %v1351
    %v1353 = vpop.f32.mrb[0].mxu0
    %1354 = vdwg.mxu0
    %v1355 = vmax.f32 %v1281, %v1283
    %v1356 = vmax.f32 %v1355, %v1352
    %v1357 = vld [vmem:[%s6] sm:$0xff]
    %v1359 = vsel %vm1021, %v1357, 0
    %1361 = vmatprep.subr.mxu0 0.0
    %1362 = vmatpush1.msra.mxu0 %v73
    %1363 = vmatprep.subr.mxu0 0.0
    %1364 = vmatpush1.msra.mxu0 %v74
    %1365 = vmatprep.subr.mxu0 0.0
    %1366 = vmatpush1.msra.mxu0 0.0
    %1367 = vmatprep.subr.mxu0 0.0
    %1368 = vmatpush1.msra.mxu0 0.0
    %1369 = vmatprep.subr.mxu0 0.0
    %1370 = vmatpush1.msra.mxu0 0.0
    %1371 = vmatprep.subr.mxu0 0.0
    %1372 = vmatpush1.msra.mxu0 0.0
    %1373 = vmatprep.subr.mxu0 0.0
    %1374 = vmatpush1.msra.mxu0 0.0
    %1375 = vmatprep.subr.mxu0 0.0
    %1376 = vmatpush1.msra.mxu0 0.0
    %1377 = vmatprep.subr.mxu0 0.0
    %1378 = vmatpush1.msra.mxu0 0.0
    %1379 = vmatprep.subr.mxu0 0.0
    %1380 = vmatpush1.msra.mxu0 0.0
    %1381 = vmatprep.subr.mxu0 0.0
    %1382 = vmatpush1.msra.mxu0 0.0
    %1383 = vmatprep.subr.mxu0 0.0
    %1384 = vmatpush1.msra.mxu0 0.0
    %1385 = vmatprep.subr.mxu0 0.0
    %1386 = vmatpush1.msra.mxu0 0.0
    %1387 = vmatprep.subr.mxu0 0.0
    %1388 = vmatpush1.msra.mxu0 0.0
    %1389 = vmatprep.subr.mxu0 0.0
    %1390 = vmatpush1.msra.mxu0 0.0
    %1391 = vmatprep.subr.mxu0 0.0
    %1392 = vmatpush1.msra.mxu0 0.0
    %1393 = vmatprep.subr.mxu0 0.0
    %1394 = vmatpush1.msra.mxu0 0.0
    %1395 = vmatprep.subr.mxu0 0.0
    %1396 = vmatpush1.msra.mxu0 0.0
    %1397 = vmatprep.subr.mxu0 0.0
    %1398 = vmatpush1.msra.mxu0 0.0
    %1399 = vmatprep.subr.mxu0 0.0
    %1400 = vmatpush1.msra.mxu0 0.0
    %1401 = vmatprep.subr.mxu0 0.0
    %1402 = vmatpush1.msra.mxu0 0.0
    %1403 = vmatprep.subr.mxu0 0.0
    %1404 = vmatpush1.msra.mxu0 0.0
    %1405 = vmatprep.subr.mxu0 0.0
    %1406 = vmatpush1.msra.mxu0 0.0
    %1407 = vmatprep.subr.mxu0 0.0
    %1408 = vmatpush1.msra.mxu0 0.0
    %1409 = vmatprep.subr.mxu0 0.0
    %1410 = vmatpush1.msra.mxu0 0.0
    %1411 = vmatprep.subr.mxu0 0.0
    %1412 = vmatpush1.msra.mxu0 0.0
    %1413 = vmatprep.subr.mxu0 0.0
    %1414 = vmatpush1.msra.mxu0 0.0
    %1415 = vmatprep.subr.mxu0 0.0
    %1416 = vmatpush1.msra.mxu0 0.0
    %1417 = vmatprep.subr.mxu0 0.0
    %1418 = vmatpush1.msra.mxu0 0.0
    %1419 = vmatprep.subr.mxu0 0.0
    %1420 = vmatpush1.msra.mxu0 0.0
    %1421 = vmatprep.subr.mxu0 0.0
    %1422 = vmatpush1.msra.mxu0 0.0
    %1423 = vmatprep.subr.mxu0 0.0
    %1424 = vmatpush1.msra.mxu0 0.0
    %1425 = vmatprep.mubr.f32.mxu0 0.0
    %1426 = vmatmul.mubr.f32.gmra.mrb[0].mxu0 %v1359
    %v1427 = vpop.f32.mrb[0].mxu0
    %v1428 = vadd.f32 0.0, %v1427
    %v1429 = vpop.f32.mrb[0].mxu0
    %1430 = vdwg.mxu0
    %v1431 = vld [vmem:[%s3] sm:$0xff]
    %v1432 = vld [vmem:[%s3 + $0x8] sm:$0xff]
    %v1433 = vld [vmem:[%s3 + $0x10] sm:$0xff]
    %v1434 = vld [vmem:[%s3 + $0x18] sm:$0xff]
    %v1435 = vld [vmem:[%s3 + $0x20] sm:$0xff]
    %v1436 = vld [vmem:[%s3 + $0x28] sm:$0xff]
    %v1437 = vld [vmem:[%s3 + $0x30] sm:$0xff]
    %v1438 = vld [vmem:[%s3 + $0x38] sm:$0xff]
    %v1439 = vld [vmem:[%s3 + $0x40] sm:$0xff]
    %v1440 = vld [vmem:[%s3 + $0x48] sm:$0xff]
    %v1441 = vld [vmem:[%s3 + $0x50] sm:$0xff]
    %v1442 = vld [vmem:[%s3 + $0x58] sm:$0xff]
    %v1443 = vld [vmem:[%s3 + $0x60] sm:$0xff]
    %v1444 = vld [vmem:[%s3 + $0x68] sm:$0xff]
    %v1445 = vld [vmem:[%s3 + $0x70] sm:$0xff]
    %v1446 = vld [vmem:[%s3 + $0x78] sm:$0xff]
    %1447 = vmatprep.subr.mxu0 0.0
    %1448 = vmatpush1.msra.mxu0 %v1431
    %1449 = vmatprep.subr.mxu0 0.0
    %1450 = vmatpush1.msra.mxu0 %v1432
    %1451 = vmatprep.subr.mxu0 0.0
    %1452 = vmatpush1.msra.mxu0 %v1433
    %1453 = vmatprep.subr.mxu0 0.0
    %1454 = vmatpush1.msra.mxu0 %v1434
    %1455 = vmatprep.subr.mxu0 0.0
    %1456 = vmatpush1.msra.mxu0 %v1435
    %1457 = vmatprep.subr.mxu0 0.0
    %1458 = vmatpush1.msra.mxu0 %v1436
    %1459 = vmatprep.subr.mxu0 0.0
    %1460 = vmatpush1.msra.mxu0 %v1437
    %1461 = vmatprep.subr.mxu0 0.0
    %1462 = vmatpush1.msra.mxu0 %v1438
    %1463 = vmatprep.subr.mxu0 0.0
    %1464 = vmatpush1.msra.mxu0 %v1439
    %1465 = vmatprep.subr.mxu0 0.0
    %1466 = vmatpush1.msra.mxu0 %v1440
    %1467 = vmatprep.subr.mxu0 0.0
    %1468 = vmatpush1.msra.mxu0 %v1441
    %1469 = vmatprep.subr.mxu0 0.0
    %1470 = vmatpush1.msra.mxu0 %v1442
    %1471 = vmatprep.subr.mxu0 0.0
    %1472 = vmatpush1.msra.mxu0 %v1443
    %1473 = vmatprep.subr.mxu0 0.0
    %1474 = vmatpush1.msra.mxu0 %v1444
    %1475 = vmatprep.subr.mxu0 0.0
    %1476 = vmatpush1.msra.mxu0 %v1445
    %1477 = vmatprep.subr.mxu0 0.0
    %1478 = vmatpush1.msra.mxu0 %v1446
    %1479 = vmatprep.subr.mxu0 0.0
    %1480 = vmatpush1.msra.mxu0 0.0
    %1481 = vmatprep.subr.mxu0 0.0
    %1482 = vmatpush1.msra.mxu0 0.0
    %1483 = vmatprep.subr.mxu0 0.0
    %1484 = vmatpush1.msra.mxu0 0.0
    %1485 = vmatprep.subr.mxu0 0.0
    %1486 = vmatpush1.msra.mxu0 0.0
    %1487 = vmatprep.subr.mxu0 0.0
    %1488 = vmatpush1.msra.mxu0 0.0
    %1489 = vmatprep.subr.mxu0 0.0
    %1490 = vmatpush1.msra.mxu0 0.0
    %1491 = vmatprep.subr.mxu0 0.0
    %1492 = vmatpush1.msra.mxu0 0.0
    %1493 = vmatprep.subr.mxu0 0.0
    %1494 = vmatpush1.msra.mxu0 0.0
    %1495 = vmatprep.subr.mxu0 0.0
    %1496 = vmatpush1.msra.mxu0 0.0
    %1497 = vmatprep.subr.mxu0 0.0
    %1498 = vmatpush1.msra.mxu0 0.0
    %1499 = vmatprep.subr.mxu0 0.0
    %1500 = vmatpush1.msra.mxu0 0.0
    %1501 = vmatprep.subr.mxu0 0.0
    %1502 = vmatpush1.msra.mxu0 0.0
    %1503 = vmatprep.subr.mxu0 0.0
    %1504 = vmatpush1.msra.mxu0 0.0
    %1505 = vmatprep.subr.mxu0 0.0
    %1506 = vmatpush1.msra.mxu0 0.0
    %1507 = vmatprep.subr.mxu0 0.0
    %1508 = vmatpush1.msra.mxu0 0.0
    %1509 = vmatprep.subr.mxu0 0.0
    %1510 = vmatpush1.msra.mxu0 0.0
    %1511 = vmatprep.mubr.f32.mxu0 0.0
    %1512 = vmatmul.mubr.f32.gmra.mrb[0].mxu0 %v1428
    %v1513 = vpop.f32.mrb[0].mxu0
    %v1514 = vadd.f32 0.0, %v1513
    %v1515 = vpop.f32.mrb[0].mxu0
    %1516 = vdwg.mxu0
    %v1517 = vadd.f32 %v1356, %v1514
    %v1518 = vld [vmem:[%s8] sm:$0x1]
    %v1520 = vlaneseq
    %v1521 = vshrl.u32 %v1520, 7
    %v1522 = vsub.s32 0, %v1521
    %v1523 = vrot.slane %v1518, %v1522
    %v1525 = vadd.f32 %v1517, %v1523
    %1526 = vst [vmem:[%s9] sm:$0xff] %v1525
    // Predicated region
    $region50: #{block_forward.1} parent=1 // pred_check
      _
    $region51: #{block_forward.1} parent=1 // pred_check_branch
      %1528 = sbr.rel (0) target = $region53
    $region52: #{block_forward.1} parent=1 // pred_region
      _
    $region53: #{block_forward.1} parent=1 // pred_fallthru
      _
    // Predicated region
    $region54: #{block_forward.1} parent=1 // pred_check
      _
    $region55: #{block_forward.1} parent=1 // pred_check_branch
      %1530 = sbr.rel (0) target = $region57
    $region56: #{block_forward.1} parent=1 // pred_region
      _
    $region57: #{block_forward.1} parent=1 // pred_fallthru
      _
    %1531 = vsyncpa [#allocation3], 1
    %1532 = vsyncpa [#allocation5], 1

</llo_original>
